<compile_context>
chip_gen: v5e
topology: v5e:2x2
jax: 0.10.0
libtpu: 0.0.40
codegen_flags: <defaults>
</compile_context>

<pallas_src>
import jax
import jax.numpy as jnp
from jax.experimental import pallas as pl
from jax.experimental.pallas import tpu as pltpu

EPS = 1e-5


def _round_up(x, m):
    return ((x + m - 1) // m) * m


def _hswish(x):
    # PyTorch Hardswish: x * relu6(x + 3) / 6
    return x * jnp.clip(x + 3.0, 0.0, 6.0) * (1.0 / 6.0)


# --------------------------------------------------------------------------
# Pallas kernel: MSF_Block forward for a tile of B batch elements.
# --------------------------------------------------------------------------
def msf_block_kernel(x_ref, w_in_ref, w_taps_ref, w_fc_ref, w_ab_ref, w_dw_ref,
                     shifts_ref, out_ref):
    B, L, cin_p = x_ref.shape
    c6_p = w_taps_ref.shape[0]
    d_p = w_fc_ref.shape[1]
    cout_p = w_dw_ref.shape[1]
    BL = B * L

    x = x_ref[...].reshape(BL, cin_p).astype(jnp.bfloat16)

    # ---- fused PW (1x1 conv+BN+hardswish) and shortcut (1x1 conv+BN) ----
    h = jnp.dot(x, w_in_ref[...], preferred_element_type=jnp.float32)   # (BL, c6_p+cout_p)
    pw = _hswish(h[:, :c6_p] + shifts_ref[0:1, :c6_p])                  # (BL, c6_p)
    sc = h[:, c6_p:c6_p + cout_p] + shifts_ref[1:2, :cout_p]            # (BL, cout_p)

    # ---- all 6 kernel-3 taps (k3 dil=1, k5 dil=2) in one MXU matmul ----
    taps = jnp.dot(pw.astype(jnp.bfloat16), w_taps_ref[...],
                   preferred_element_type=jnp.float32)                  # (BL, 6*c6_p)

    # per-row position inside its sample (rolls cross sample boundaries; masks fix it)
    lidx = jax.lax.broadcasted_iota(jnp.int32, (BL, 1), 0) % L

    def shift_down(y, dil):      # y[l - dil], zero at the start of each sample
        return jnp.where(lidx >= dil, pltpu.roll(y, dil, axis=0), 0.0)

    def shift_up(y, dil):        # y[l + dil], zero at the end of each sample
        return jnp.where(lidx < L - dil, pltpu.roll(y, BL - dil, axis=0), 0.0)

    u3 = _hswish(shift_down(taps[:, 0 * c6_p:1 * c6_p], 1)
                 + taps[:, 1 * c6_p:2 * c6_p]
                 + shift_up(taps[:, 2 * c6_p:3 * c6_p], 1)
                 + shifts_ref[2:3, :c6_p])
    u5 = _hswish(shift_down(taps[:, 3 * c6_p:4 * c6_p], 2)
                 + taps[:, 4 * c6_p:5 * c6_p]
                 + shift_up(taps[:, 5 * c6_p:6 * c6_p], 2)
                 + shifts_ref[3:4, :c6_p])
    u = u3 + u5

    # ---- SK attention: per-sample global avg pool -> fc -> 2-way softmax ----
    s = jnp.mean(u.reshape(B, L, c6_p), axis=1)                         # (B, c6_p)
    z = _hswish(jnp.dot(s.astype(jnp.bfloat16), w_fc_ref[...],
                        preferred_element_type=jnp.float32)
                + shifts_ref[4:5, :d_p])                                # (B, d_p)
    logits = jnp.dot(z.astype(jnp.bfloat16), w_ab_ref[...],
                     preferred_element_type=jnp.float32)                # (B, 2*c6_p)
    # exp(A)/(exp(A)+exp(B)) == sigmoid(A - B): overflow-robust, reciprocal on EUP
    a = pl.reciprocal(1.0 + jnp.exp(logits[:, c6_p:2 * c6_p] - logits[:, :c6_p]),
                      approx=True)
    b = 1.0 - a
    v = (a[:, None, :] * u3.reshape(B, L, c6_p)
         + b[:, None, :] * u5.reshape(B, L, c6_p)).reshape(BL, c6_p)

    # ---- DW tail (1x1 conv + BN) + residual add ----
    dw = jnp.dot(v.astype(jnp.bfloat16), w_dw_ref[...],
                 preferred_element_type=jnp.float32) + shifts_ref[5:6, :cout_p]
    out_ref[...] = (sc + dw).reshape(B, L, cout_p)


# --------------------------------------------------------------------------
# Parameter init (deterministic, PyTorch shapes)
# --------------------------------------------------------------------------
def init_params(key, cin, cout):
    c6 = 6 * cin
    d = max(int(c6 / 4), 8)
    keys = iter(jax.random.split(key, 64))

    def w(shape, s=0.1):
        return (s * jax.random.normal(next(keys), shape)).astype(jnp.float32)

    def bn(c):
        return {"gamma": (1.0 + 0.1 * jax.random.normal(next(keys), (c,))).astype(jnp.float32),
                "beta": w((c,)),
                "mean": w((c,)),
                "var": (1.0 + 0.1 * jnp.abs(jax.random.normal(next(keys), (c,)))).astype(jnp.float32)}

    return {
        "cin": cin, "cout": cout, "c6": c6, "d": d,
        "pw_w": w((c6, cin, 1)), "pw_b": w((c6,)), "pw_bn": bn(c6),
        "k3_w": w((c6, c6, 3)), "k3_bn": bn(c6),
        "k5_w": w((c6, c6, 3)), "k5_bn": bn(c6),
        "fc_w": w((d, c6, 1)), "fc_bn": bn(d),
        "A_w": w((c6, d, 1)), "B_w": w((c6, d, 1)),
        "dw_w": w((cout, c6, 1)), "dw_b": w((cout,)), "dw_bn": bn(cout),
        "sc_w": w((cout, cin, 1)), "sc_b": w((cout,)), "sc_bn": bn(cout),
    }


def _bn_fold(bn, bias=None):
    scale = bn["gamma"] / jnp.sqrt(bn["var"] + EPS)
    shift = bn["beta"] - bn["mean"] * scale
    if bias is not None:
        shift = shift + bias * scale
    return scale, shift


def _pack_kernel_params(p):
    """Fold BN scales (and conv biases) into lane-padded, fused bf16 matmul weights
    plus one packed f32 shift table."""
    cin, cout, c6, d = p["cin"], p["cout"], p["c6"], p["d"]
    cin_p = _round_up(cin, 128)
    c6_p = _round_up(c6, 128)
    d_p = _round_up(d, 128)
    cout_p = _round_up(cout, 128)

    spw, bpw = _bn_fold(p["pw_bn"], p["pw_b"])
    s3, b3 = _bn_fold(p["k3_bn"])
    s5, b5 = _bn_fold(p["k5_bn"])
    sfc, bfc = _bn_fold(p["fc_bn"])
    sdw, bdw = _bn_fold(p["dw_bn"], p["dw_b"])
    ssc, bsc = _bn_fold(p["sc_bn"], p["sc_b"])

    # fused x-matmul: [PW | shortcut]
    w_in = jnp.zeros((cin_p, c6_p + cout_p), jnp.float32)
    w_in = w_in.at[:cin, :c6].set(p["pw_w"][:, :, 0].T * spw[None, :])
    w_in = w_in.at[:cin, c6_p:c6_p + cout].set(p["sc_w"][:, :, 0].T * ssc[None, :])

    # fused 6-tap matmul: [k3_t0 | k3_t1 | k3_t2 | k5_t0 | k5_t1 | k5_t2]
    w_taps = jnp.zeros((c6_p, 6 * c6_p), jnp.float32)
    for k in range(3):
        w_taps = w_taps.at[:c6, k * c6_p:k * c6_p + c6].set(
            p["k3_w"][:, :, k].T * s3[None, :])
        w_taps = w_taps.at[:c6, (3 + k) * c6_p:(3 + k) * c6_p + c6].set(
            p["k5_w"][:, :, k].T * s5[None, :])

    w_fc = jnp.zeros((c6_p, d_p), jnp.float32).at[:c6, :d].set(
        p["fc_w"][:, :, 0].T * sfc[None, :])
    w_ab = jnp.zeros((d_p, 2 * c6_p), jnp.float32)
    w_ab = w_ab.at[:d, :c6].set(p["A_w"][:, :, 0].T)
    w_ab = w_ab.at[:d, c6_p:c6_p + c6].set(p["B_w"][:, :, 0].T)
    w_dw = jnp.zeros((c6_p, cout_p), jnp.float32).at[:c6, :cout].set(
        p["dw_w"][:, :, 0].T * sdw[None, :])

    # one packed shift table: rows = [bpw, bsc, b3, b5, bfc, bdw]
    P = max(c6_p, cout_p, d_p)
    shifts = jnp.zeros((8, P), jnp.float32)
    shifts = shifts.at[0, :c6].set(bpw)
    shifts = shifts.at[1, :cout].set(bsc)
    shifts = shifts.at[2, :c6].set(b3)
    shifts = shifts.at[3, :c6].set(b5)
    shifts = shifts.at[4, :d].set(bfc)
    shifts = shifts.at[5, :cout].set(bdw)

    weights = [w.astype(jnp.bfloat16) for w in (w_in, w_taps, w_fc, w_ab, w_dw)]
    dims = {"cin_p": cin_p, "c6_p": c6_p, "d_p": d_p, "cout_p": cout_p}
    return weights, shifts, dims


# --------------------------------------------------------------------------
# Wrapper: (N, C, L) in -> (N, C, L) out
# --------------------------------------------------------------------------
def msf_block_forward(x_ncl, params, b_tile=4):
    N, Cin, L = x_ncl.shape
    Cout = params["cout"]
    (w_in, w_taps, w_fc, w_ab, w_dw), shifts, dims = _pack_kernel_params(params)
    cin_p, c6_p, cout_p = dims["cin_p"], dims["c6_p"], dims["cout_p"]

    b_tile = max(1, min(b_tile, N))
    n_pad = pl.cdiv(N, b_tile) * b_tile

    # layout boundary: (N, C, L) -> (N, L, C), zero-pad batch and channels to lane width
    x_nlc = jnp.transpose(x_ncl, (0, 2, 1)).astype(jnp.float32)
    x_p = jnp.zeros((n_pad, L, cin_p), jnp.float32).at[:N, :, :Cin].set(x_nlc)

    def const2d(arr):
        return pl.BlockSpec(arr.shape, lambda n: (0, 0))

    out = pl.pallas_call(
        msf_block_kernel,
        out_shape=jax.ShapeDtypeStruct((n_pad, L, cout_p), jnp.float32),
        grid_spec=pltpu.PrefetchScalarGridSpec(
            num_scalar_prefetch=0,
            grid=(n_pad // b_tile,),
            in_specs=[pl.BlockSpec((b_tile, L, cin_p), lambda n: (n, 0, 0)),
                      const2d(w_in), const2d(w_taps), const2d(w_fc),
                      const2d(w_ab), const2d(w_dw), const2d(shifts)],
            out_specs=pl.BlockSpec((b_tile, L, cout_p), lambda n: (n, 0, 0)),
        ),
        compiler_params=pltpu.CompilerParams(
            dimension_semantics=("parallel",),
            vmem_limit_bytes=32 * 1024 * 1024,   # safe on v5e/v6e (128 MiB) and v7x (64 MiB)
        ),
    )(x_p, w_in, w_taps, w_fc, w_ab, w_dw, shifts)

    return jnp.transpose(out[:N, :, :Cout], (0, 2, 1))        # (N, Cout, L)


# --------------------------------------------------------------------------
# Pure-JAX reference (mirrors the PyTorch module, eval-mode BatchNorm, f32)
# --------------------------------------------------------------------------
def _conv1d(x, w, bias=None, padding=0, dilation=1, stride=1):
    out = jax.lax.conv_general_dilated(
        x, w, window_strides=(stride,), padding=[(padding, padding)],
        rhs_dilation=(dilation,), dimension_numbers=("NCH", "OIH", "NCH"))
    if bias is not None:
        out = out + bias[None, :, None]
    return out


def _bn1d(x, bn):
    return ((x - bn["mean"][None, :, None])
            / jnp.sqrt(bn["var"][None, :, None] + EPS)
            * bn["gamma"][None, :, None] + bn["beta"][None, :, None])


def msf_block_reference(x, p):
    pw = _hswish(_bn1d(_conv1d(x, p["pw_w"], p["pw_b"]), p["pw_bn"]))
    u3 = _hswish(_bn1d(_conv1d(pw, p["k3_w"], padding=1, dilation=1), p["k3_bn"]))
    u5 = _hswish(_bn1d(_conv1d(pw, p["k5_w"], padding=2, dilation=2), p["k5_bn"]))
    u = u3 + u5
    s = jnp.mean(u, axis=2, keepdims=True)
    z = _hswish(_bn1d(_conv1d(s, p["fc_w"]), p["fc_bn"]))
    eA = jnp.exp(_conv1d(z, p["A_w"]))
    eB = jnp.exp(_conv1d(z, p["B_w"]))
    a = eA / (eA + eB)
    b = eB / (eA + eB)
    v = a * u3 + b * u5
    dw = _bn1d(_conv1d(v, p["dw_w"], p["dw_b"]), p["dw_bn"])
    sc = _bn1d(_conv1d(x, p["sc_w"], p["sc_b"]), p["sc_bn"])
    return sc + dw


# --------------------------------------------------------------------------
if __name__ == "__main__":
    N, Cin, Cout, L = 8, 4, 8, 16

    key = jax.random.PRNGKey(0)
    k_x, k_p = jax.random.split(key)
    x = jax.random.normal(k_x, (N, Cin, L), dtype=jnp.float32)
    params = init_params(k_p, Cin, Cout)

    out = jax.block_until_ready(msf_block_forward(x, params, b_tile=4))
    ref = jax.block_until_ready(msf_block_reference(x, params))

    assert out.shape == (N, Cout, L), out.shape
    # bf16 matmul inputs (f32 accumulation) + approx reciprocal -> bf16-level tolerance
    err = float(jnp.max(jnp.abs(out - ref)))
    assert jnp.allclose(out, ref, rtol=1e-2, atol=1e-2), err

    print("KERNEL_OK")
</pallas_src>

<mosaic_0001>
module attributes {stable_mosaic.version = 11 : i64} {
  func.func @msf_block_kernel(%arg0: i32, %arg1: memref<4x16x128xf32, #tpu.memory_space<vmem>>, %arg2: memref<128x256xbf16, #tpu.memory_space<vmem>>, %arg3: memref<128x768xbf16, #tpu.memory_space<vmem>>, %arg4: memref<128x128xbf16, #tpu.memory_space<vmem>>, %arg5: memref<128x256xbf16, #tpu.memory_space<vmem>>, %arg6: memref<128x128xbf16, #tpu.memory_space<vmem>>, %arg7: memref<8x128xf32, #tpu.memory_space<vmem>>, %arg8: memref<4x16x128xf32, #tpu.memory_space<vmem>>) attributes {dimension_semantics = [#tpu.dimension_semantics<parallel>], iteration_bounds = array<i64: 2>, scalar_prefetch = 0 : i64, scratch_operands = 0 : i64, tpu.core_type = #tpu.core_type<tc>, window_params = [{transform_indices = @transform_0, window_bounds = array<i64: 4, 16, 128>}, {pipeline_mode = #tpu.pipeline_mode<synchronous>, transform_indices = @transform_1, window_bounds = array<i64: 128, 256>}, {pipeline_mode = #tpu.pipeline_mode<synchronous>, transform_indices = @transform_2, window_bounds = array<i64: 128, 768>}, {pipeline_mode = #tpu.pipeline_mode<synchronous>, transform_indices = @transform_3, window_bounds = array<i64: 128, 128>}, {pipeline_mode = #tpu.pipeline_mode<synchronous>, transform_indices = @transform_4, window_bounds = array<i64: 128, 256>}, {pipeline_mode = #tpu.pipeline_mode<synchronous>, transform_indices = @transform_5, window_bounds = array<i64: 128, 128>}, {pipeline_mode = #tpu.pipeline_mode<synchronous>, transform_indices = @transform_6, window_bounds = array<i64: 8, 128>}, {transform_indices = @transform_7, window_bounds = array<i64: 4, 16, 128>}]} {
    %c0 = arith.constant 0 : index
    %c0_0 = arith.constant 0 : index
    %c0_1 = arith.constant 0 : index
    %0 = vector.load %arg1[%c0, %c0_0, %c0_1] : memref<4x16x128xf32, #tpu.memory_space<vmem>>, vector<4x16x128xf32>
    %1 = vector.shape_cast %0 : vector<4x16x128xf32> to vector<64x128xf32>
    %2 = arith.truncf %1 : vector<64x128xf32> to vector<64x128xbf16>
    %c0_2 = arith.constant 0 : index
    %c0_3 = arith.constant 0 : index
    %3 = vector.load %arg2[%c0_2, %c0_3] : memref<128x256xbf16, #tpu.memory_space<vmem>>, vector<128x256xbf16>
    %cst = arith.constant dense<0.000000e+00> : vector<64x256xf32>
    %4 = tpu.matmul %2, %3, %cst {dimension_numbers = #tpu.dot_dimension_numbers<[1], [0], [0], [1], [0, 0, 1, 1], [], []>} : vector<64x128xbf16>, vector<128x256xbf16>, vector<64x256xf32> -> vector<64x256xf32>
    %5 = vector.extract_strided_slice %4 {offsets = [0, 0], sizes = [64, 128], strides = [1, 1]} : vector<64x256xf32> to vector<64x128xf32>
    %c0_4 = arith.constant 0 : index
    %c0_5 = arith.constant 0 : index
    %6 = vector.load %arg7[%c0_4, %c0_5] : memref<8x128xf32, #tpu.memory_space<vmem>>, vector<1x128xf32>
    %7 = vector.broadcast %6 : vector<1x128xf32> to vector<64x128xf32>
    %8 = arith.addf %5, %7 : vector<64x128xf32>
    %cst_6 = arith.constant 3.000000e+00 : f32
    %9 = vector.broadcast %cst_6 : f32 to vector<64x128xf32>
    %10 = arith.addf %8, %9 : vector<64x128xf32>
    %cst_7 = arith.constant 0.000000e+00 : f32
    %cst_8 = arith.constant 6.000000e+00 : f32
    %11 = vector.broadcast %cst_7 : f32 to vector<64x128xf32>
    %12 = arith.maximumf %11, %10 : vector<64x128xf32>
    %13 = vector.broadcast %cst_8 : f32 to vector<64x128xf32>
    %14 = arith.minimumf %13, %12 : vector<64x128xf32>
    %15 = arith.mulf %8, %14 : vector<64x128xf32>
    %cst_9 = arith.constant 0.166666672 : f32
    %16 = vector.broadcast %cst_9 : f32 to vector<64x128xf32>
    %17 = arith.mulf %15, %16 : vector<64x128xf32>
    %18 = vector.extract_strided_slice %4 {offsets = [0, 128], sizes = [64, 128], strides = [1, 1]} : vector<64x256xf32> to vector<64x128xf32>
    %c1 = arith.constant 1 : index
    %c0_10 = arith.constant 0 : index
    %19 = vector.load %arg7[%c1, %c0_10] : memref<8x128xf32, #tpu.memory_space<vmem>>, vector<1x128xf32>
    %20 = vector.broadcast %19 : vector<1x128xf32> to vector<64x128xf32>
    %21 = arith.addf %18, %20 : vector<64x128xf32>
    %22 = arith.truncf %17 : vector<64x128xf32> to vector<64x128xbf16>
    %c0_11 = arith.constant 0 : index
    %c0_12 = arith.constant 0 : index
    %23 = vector.load %arg3[%c0_11, %c0_12] : memref<128x768xbf16, #tpu.memory_space<vmem>>, vector<128x768xbf16>
    %cst_13 = arith.constant dense<0.000000e+00> : vector<64x768xf32>
    %24 = tpu.matmul %22, %23, %cst_13 {dimension_numbers = #tpu.dot_dimension_numbers<[1], [0], [0], [1], [0, 0, 1, 1], [], []>} : vector<64x128xbf16>, vector<128x768xbf16>, vector<64x768xf32> -> vector<64x768xf32>
    %25 = tpu.iota {dimensions = array<i32: 0>} : vector<64x1xi32>
    %c16_i32 = arith.constant 16 : i32
    %c0_i32 = arith.constant 0 : i32
    %26 = arith.cmpi eq, %c16_i32, %c0_i32 : i32
    %c1_i32 = arith.constant 1 : i32
    %27 = arith.select %26, %c1_i32, %c16_i32 : i32
    %28 = vector.broadcast %27 : i32 to vector<64x1xi32>
    %29 = arith.remsi %25, %28 : vector<64x1xi32>
    %c0_i32_14 = arith.constant 0 : i32
    %30 = vector.broadcast %c0_i32_14 : i32 to vector<64x1xi32>
    %31 = arith.cmpi ne, %29, %30 : vector<64x1xi32>
    %c0_i32_15 = arith.constant 0 : i32
    %32 = vector.broadcast %c0_i32_15 : i32 to vector<64x1xi32>
    %33 = arith.cmpi slt, %29, %32 : vector<64x1xi32>
    %c0_i32_16 = arith.constant 0 : i32
    %34 = arith.cmpi slt, %27, %c0_i32_16 : i32
    %35 = vector.broadcast %34 : i1 to vector<64x1xi1>
    %36 = vector.broadcast %35 : vector<64x1xi1> to vector<64x1xi1>
    %37 = arith.xori %33, %36 : vector<64x1xi1>
    %38 = arith.andi %37, %31 : vector<64x1xi1>
    %39 = vector.broadcast %27 : i32 to vector<64x1xi32>
    %40 = arith.addi %29, %39 : vector<64x1xi32>
    %41 = arith.select %38, %40, %29 : vector<64x1xi1>, vector<64x1xi32>
    %42 = vector.extract_strided_slice %24 {offsets = [0, 0], sizes = [64, 128], strides = [1, 1]} : vector<64x768xf32> to vector<64x128xf32>
    %c1_i32_17 = arith.constant 1 : i32
    %43 = vector.broadcast %c1_i32_17 : i32 to vector<64x1xi32>
    %44 = arith.cmpi sge, %41, %43 : vector<64x1xi32>
    %c1_i32_18 = arith.constant 1 : i32
    %45 = tpu.dynamic_rotate %42 by %c1_i32_18 dim 0 : vector<64x128xf32>, i32 -> vector<64x128xf32>
    %cst_19 = arith.constant 0.000000e+00 : f32
    %46 = vector.shape_cast %44 : vector<64x1xi1> to vector<64x1xi1>
    %47 = vector.broadcast %46 : vector<64x1xi1> to vector<64x128xi1>
    %48 = vector.broadcast %cst_19 : f32 to vector<64x128xf32>
    %49 = arith.select %47, %45, %48 : vector<64x128xi1>, vector<64x128xf32>
    %50 = vector.extract_strided_slice %24 {offsets = [0, 128], sizes = [64, 128], strides = [1, 1]} : vector<64x768xf32> to vector<64x128xf32>
    %51 = arith.addf %49, %50 : vector<64x128xf32>
    %52 = vector.extract_strided_slice %24 {offsets = [0, 256], sizes = [64, 128], strides = [1, 1]} : vector<64x768xf32> to vector<64x128xf32>
    %c15_i32 = arith.constant 15 : i32
    %53 = vector.broadcast %c15_i32 : i32 to vector<64x1xi32>
    %54 = arith.cmpi slt, %41, %53 : vector<64x1xi32>
    %c63_i32 = arith.constant 63 : i32
    %55 = tpu.dynamic_rotate %52 by %c63_i32 dim 0 : vector<64x128xf32>, i32 -> vector<64x128xf32>
    %cst_20 = arith.constant 0.000000e+00 : f32
    %56 = vector.shape_cast %54 : vector<64x1xi1> to vector<64x1xi1>
    %57 = vector.broadcast %56 : vector<64x1xi1> to vector<64x128xi1>
    %58 = vector.broadcast %cst_20 : f32 to vector<64x128xf32>
    %59 = arith.select %57, %55, %58 : vector<64x128xi1>, vector<64x128xf32>
    %60 = arith.addf %51, %59 : vector<64x128xf32>
    %c2 = arith.constant 2 : index
    %c0_21 = arith.constant 0 : index
    %61 = vector.load %arg7[%c2, %c0_21] : memref<8x128xf32, #tpu.memory_space<vmem>>, vector<1x128xf32>
    %62 = vector.broadcast %61 : vector<1x128xf32> to vector<64x128xf32>
    %63 = arith.addf %60, %62 : vector<64x128xf32>
    %cst_22 = arith.constant 3.000000e+00 : f32
    %64 = vector.broadcast %cst_22 : f32 to vector<64x128xf32>
    %65 = arith.addf %63, %64 : vector<64x128xf32>
    %cst_23 = arith.constant 0.000000e+00 : f32
    %cst_24 = arith.constant 6.000000e+00 : f32
    %66 = vector.broadcast %cst_23 : f32 to vector<64x128xf32>
    %67 = arith.maximumf %66, %65 : vector<64x128xf32>
    %68 = vector.broadcast %cst_24 : f32 to vector<64x128xf32>
    %69 = arith.minimumf %68, %67 : vector<64x128xf32>
    %70 = arith.mulf %63, %69 : vector<64x128xf32>
    %cst_25 = arith.constant 0.166666672 : f32
    %71 = vector.broadcast %cst_25 : f32 to vector<64x128xf32>
    %72 = arith.mulf %70, %71 : vector<64x128xf32>
    %73 = vector.extract_strided_slice %24 {offsets = [0, 384], sizes = [64, 128], strides = [1, 1]} : vector<64x768xf32> to vector<64x128xf32>
    %c2_i32 = arith.constant 2 : i32
    %74 = vector.broadcast %c2_i32 : i32 to vector<64x1xi32>
    %75 = arith.cmpi sge, %41, %74 : vector<64x1xi32>
    %c2_i32_26 = arith.constant 2 : i32
    %76 = tpu.dynamic_rotate %73 by %c2_i32_26 dim 0 : vector<64x128xf32>, i32 -> vector<64x128xf32>
    %cst_27 = arith.constant 0.000000e+00 : f32
    %77 = vector.shape_cast %75 : vector<64x1xi1> to vector<64x1xi1>
    %78 = vector.broadcast %77 : vector<64x1xi1> to vector<64x128xi1>
    %79 = vector.broadcast %cst_27 : f32 to vector<64x128xf32>
    %80 = arith.select %78, %76, %79 : vector<64x128xi1>, vector<64x128xf32>
    %81 = vector.extract_strided_slice %24 {offsets = [0, 512], sizes = [64, 128], strides = [1, 1]} : vector<64x768xf32> to vector<64x128xf32>
    %82 = arith.addf %80, %81 : vector<64x128xf32>
    %83 = vector.extract_strided_slice %24 {offsets = [0, 640], sizes = [64, 128], strides = [1, 1]} : vector<64x768xf32> to vector<64x128xf32>
    %c14_i32 = arith.constant 14 : i32
    %84 = vector.broadcast %c14_i32 : i32 to vector<64x1xi32>
    %85 = arith.cmpi slt, %41, %84 : vector<64x1xi32>
    %c62_i32 = arith.constant 62 : i32
    %86 = tpu.dynamic_rotate %83 by %c62_i32 dim 0 : vector<64x128xf32>, i32 -> vector<64x128xf32>
    %cst_28 = arith.constant 0.000000e+00 : f32
    %87 = vector.shape_cast %85 : vector<64x1xi1> to vector<64x1xi1>
    %88 = vector.broadcast %87 : vector<64x1xi1> to vector<64x128xi1>
    %89 = vector.broadcast %cst_28 : f32 to vector<64x128xf32>
    %90 = arith.select %88, %86, %89 : vector<64x128xi1>, vector<64x128xf32>
    %91 = arith.addf %82, %90 : vector<64x128xf32>
    %c3 = arith.constant 3 : index
    %c0_29 = arith.constant 0 : index
    %92 = vector.load %arg7[%c3, %c0_29] : memref<8x128xf32, #tpu.memory_space<vmem>>, vector<1x128xf32>
    %93 = vector.broadcast %92 : vector<1x128xf32> to vector<64x128xf32>
    %94 = arith.addf %91, %93 : vector<64x128xf32>
    %cst_30 = arith.constant 3.000000e+00 : f32
    %95 = vector.broadcast %cst_30 : f32 to vector<64x128xf32>
    %96 = arith.addf %94, %95 : vector<64x128xf32>
    %cst_31 = arith.constant 0.000000e+00 : f32
    %cst_32 = arith.constant 6.000000e+00 : f32
    %97 = vector.broadcast %cst_31 : f32 to vector<64x128xf32>
    %98 = arith.maximumf %97, %96 : vector<64x128xf32>
    %99 = vector.broadcast %cst_32 : f32 to vector<64x128xf32>
    %100 = arith.minimumf %99, %98 : vector<64x128xf32>
    %101 = arith.mulf %94, %100 : vector<64x128xf32>
    %cst_33 = arith.constant 0.166666672 : f32
    %102 = vector.broadcast %cst_33 : f32 to vector<64x128xf32>
    %103 = arith.mulf %101, %102 : vector<64x128xf32>
    %104 = arith.addf %72, %103 : vector<64x128xf32>
    %105 = vector.shape_cast %104 : vector<64x128xf32> to vector<4x16x128xf32>
    %cst_34 = arith.constant dense<0.000000e+00> : vector<4x128xf32>
    %106 = vector.multi_reduction <add>, %105, %cst_34 [1] : vector<4x16x128xf32> to vector<4x128xf32>
    %cst_35 = arith.constant 1.600000e+01 : f32
    %107 = vector.broadcast %cst_35 : f32 to vector<4x128xf32>
    %108 = arith.divf %106, %107 : vector<4x128xf32>
    %109 = arith.truncf %108 : vector<4x128xf32> to vector<4x128xbf16>
    %c0_36 = arith.constant 0 : index
    %c0_37 = arith.constant 0 : index
    %110 = vector.load %arg4[%c0_36, %c0_37] : memref<128x128xbf16, #tpu.memory_space<vmem>>, vector<128x128xbf16>
    %cst_38 = arith.constant dense<0.000000e+00> : vector<4x128xf32>
    %111 = tpu.matmul %109, %110, %cst_38 {dimension_numbers = #tpu.dot_dimension_numbers<[1], [0], [0], [1], [0, 0, 1, 1], [], []>} : vector<4x128xbf16>, vector<128x128xbf16>, vector<4x128xf32> -> vector<4x128xf32>
    %c4 = arith.constant 4 : index
    %c0_39 = arith.constant 0 : index
    %112 = vector.load %arg7[%c4, %c0_39] : memref<8x128xf32, #tpu.memory_space<vmem>>, vector<1x128xf32>
    %113 = vector.broadcast %112 : vector<1x128xf32> to vector<4x128xf32>
    %114 = arith.addf %111, %113 : vector<4x128xf32>
    %cst_40 = arith.constant 3.000000e+00 : f32
    %115 = vector.broadcast %cst_40 : f32 to vector<4x128xf32>
    %116 = arith.addf %114, %115 : vector<4x128xf32>
    %cst_41 = arith.constant 0.000000e+00 : f32
    %cst_42 = arith.constant 6.000000e+00 : f32
    %117 = vector.broadcast %cst_41 : f32 to vector<4x128xf32>
    %118 = arith.maximumf %117, %116 : vector<4x128xf32>
    %119 = vector.broadcast %cst_42 : f32 to vector<4x128xf32>
    %120 = arith.minimumf %119, %118 : vector<4x128xf32>
    %121 = arith.mulf %114, %120 : vector<4x128xf32>
    %cst_43 = arith.constant 0.166666672 : f32
    %122 = vector.broadcast %cst_43 : f32 to vector<4x128xf32>
    %123 = arith.mulf %121, %122 : vector<4x128xf32>
    %124 = arith.truncf %123 : vector<4x128xf32> to vector<4x128xbf16>
    %c0_44 = arith.constant 0 : index
    %c0_45 = arith.constant 0 : index
    %125 = vector.load %arg5[%c0_44, %c0_45] : memref<128x256xbf16, #tpu.memory_space<vmem>>, vector<128x256xbf16>
    %cst_46 = arith.constant dense<0.000000e+00> : vector<4x256xf32>
    %126 = tpu.matmul %124, %125, %cst_46 {dimension_numbers = #tpu.dot_dimension_numbers<[1], [0], [0], [1], [0, 0, 1, 1], [], []>} : vector<4x128xbf16>, vector<128x256xbf16>, vector<4x256xf32> -> vector<4x256xf32>
    %127 = vector.extract_strided_slice %126 {offsets = [0, 128], sizes = [4, 128], strides = [1, 1]} : vector<4x256xf32> to vector<4x128xf32>
    %128 = vector.extract_strided_slice %126 {offsets = [0, 0], sizes = [4, 128], strides = [1, 1]} : vector<4x256xf32> to vector<4x128xf32>
    %129 = arith.subf %127, %128 : vector<4x128xf32>
    %130 = math.exp %129 : vector<4x128xf32>
    %cst_47 = arith.constant 1.000000e+00 : f32
    %131 = vector.broadcast %cst_47 : f32 to vector<4x128xf32>
    %132 = arith.addf %131, %130 : vector<4x128xf32>
    %133 = tpu.reciprocal %132 {approx = true} : vector<4x128xf32> -> vector<4x128xf32>
    %cst_48 = arith.constant 1.000000e+00 : f32
    %134 = vector.broadcast %cst_48 : f32 to vector<4x128xf32>
    %135 = arith.subf %134, %133 : vector<4x128xf32>
    %136 = vector.shape_cast %133 : vector<4x128xf32> to vector<4x1x128xf32>
    %137 = vector.shape_cast %72 : vector<64x128xf32> to vector<4x16x128xf32>
    %138 = vector.broadcast %136 : vector<4x1x128xf32> to vector<4x16x128xf32>
    %139 = arith.mulf %138, %137 : vector<4x16x128xf32>
    %140 = vector.shape_cast %135 : vector<4x128xf32> to vector<4x1x128xf32>
    %141 = vector.shape_cast %103 : vector<64x128xf32> to vector<4x16x128xf32>
    %142 = vector.broadcast %140 : vector<4x1x128xf32> to vector<4x16x128xf32>
    %143 = arith.mulf %142, %141 : vector<4x16x128xf32>
    %144 = arith.addf %139, %143 : vector<4x16x128xf32>
    %145 = vector.shape_cast %144 : vector<4x16x128xf32> to vector<64x128xf32>
    %146 = arith.truncf %145 : vector<64x128xf32> to vector<64x128xbf16>
    %c0_49 = arith.constant 0 : index
    %c0_50 = arith.constant 0 : index
    %147 = vector.load %arg6[%c0_49, %c0_50] : memref<128x128xbf16, #tpu.memory_space<vmem>>, vector<128x128xbf16>
    %cst_51 = arith.constant dense<0.000000e+00> : vector<64x128xf32>
    %148 = tpu.matmul %146, %147, %cst_51 {dimension_numbers = #tpu.dot_dimension_numbers<[1], [0], [0], [1], [0, 0, 1, 1], [], []>} : vector<64x128xbf16>, vector<128x128xbf16>, vector<64x128xf32> -> vector<64x128xf32>
    %c5 = arith.constant 5 : index
    %c0_52 = arith.constant 0 : index
    %149 = vector.load %arg7[%c5, %c0_52] : memref<8x128xf32, #tpu.memory_space<vmem>>, vector<1x128xf32>
    %150 = vector.broadcast %149 : vector<1x128xf32> to vector<64x128xf32>
    %151 = arith.addf %148, %150 : vector<64x128xf32>
    %152 = arith.addf %21, %151 : vector<64x128xf32>
    %153 = vector.shape_cast %152 : vector<64x128xf32> to vector<4x16x128xf32>
    %c0_53 = arith.constant 0 : index
    %c0_54 = arith.constant 0 : index
    %c0_55 = arith.constant 0 : index
    %154 = vector.load %arg8[%c0_53, %c0_54, %c0_55] : memref<4x16x128xf32, #tpu.memory_space<vmem>>, vector<4x16x128xf32>
    tpu.vector_store %arg8[%c0_53, %c0_54, %c0_55], %153 {strides = array<i32>} : memref<4x16x128xf32, #tpu.memory_space<vmem>>, vector<4x16x128xf32>,
    return
  }
  func.func @transform_0(%arg0: i32) -> (i32, i32, i32) {
    %c0_i32 = arith.constant 0 : i32
    %c0_i32_0 = arith.constant 0 : i32
    %c0_i32_1 = arith.constant 0 : i32
    return %arg0, %c0_i32, %c0_i32_0 : i32, i32, i32
  }
  func.func @transform_1(%arg0: i32) -> (i32, i32) {
    %c0_i32 = arith.constant 0 : i32
    %c0_i32_0 = arith.constant 0 : i32
    %c0_i32_1 = arith.constant 0 : i32
    return %c0_i32, %c0_i32_0 : i32, i32
  }
  func.func @transform_2(%arg0: i32) -> (i32, i32) {
    %c0_i32 = arith.constant 0 : i32
    %c0_i32_0 = arith.constant 0 : i32
    %c0_i32_1 = arith.constant 0 : i32
    return %c0_i32, %c0_i32_0 : i32, i32
  }
  func.func @transform_3(%arg0: i32) -> (i32, i32) {
    %c0_i32 = arith.constant 0 : i32
    %c0_i32_0 = arith.constant 0 : i32
    %c0_i32_1 = arith.constant 0 : i32
    return %c0_i32, %c0_i32_0 : i32, i32
  }
  func.func @transform_4(%arg0: i32) -> (i32, i32) {
    %c0_i32 = arith.constant 0 : i32
    %c0_i32_0 = arith.constant 0 : i32
    %c0_i32_1 = arith.constant 0 : i32
    return %c0_i32, %c0_i32_0 : i32, i32
  }
  func.func @transform_5(%arg0: i32) -> (i32, i32) {
    %c0_i32 = arith.constant 0 : i32
    %c0_i32_0 = arith.constant 0 : i32
    %c0_i32_1 = arith.constant 0 : i32
    return %c0_i32, %c0_i32_0 : i32, i32
  }
  func.func @transform_6(%arg0: i32) -> (i32, i32) {
    %c0_i32 = arith.constant 0 : i32
    %c0_i32_0 = arith.constant 0 : i32
    %c0_i32_1 = arith.constant 0 : i32
    return %c0_i32, %c0_i32_0 : i32, i32
  }
  func.func @transform_7(%arg0: i32) -> (i32, i32, i32) {
    %c0_i32 = arith.constant 0 : i32
    %c0_i32_0 = arith.constant 0 : i32
    %c0_i32_1 = arith.constant 0 : i32
    return %arg0, %c0_i32, %c0_i32_0 : i32, i32, i32
  }
}

</mosaic_0001>

<llo_original>
// kernel: tpu_custom_call.1
$region0: #{tpu_custom_call.1}
  #allocation0 [shape = 'u32[]', space=smem, size = 0x4, offset = 0x4, fixed_abs, tag = 'smem constant byte address 0x4 - core index']
  #allocation1 [shape = 'u32[72,128]{1,0:T(1,128)}', space=vmem, size = 0x9000, scoped, tag = 'internal scratch']
  %s0 = inlined_call_operand.hbm [shape: f32[8,16,128], index: 0, kind: input, shape index: {}]
  %s1 = inlined_call_operand.hbm [shape: bf16[128,256], index: 1, kind: input, shape index: {}]
  %s2 = inlined_call_operand.hbm [shape: bf16[128,768], index: 2, kind: input, shape index: {}]
  %s3 = inlined_call_operand.hbm [shape: bf16[128,128], index: 3, kind: input, shape index: {}]
  %s4 = inlined_call_operand.hbm [shape: bf16[128,256], index: 4, kind: input, shape index: {}]
  %s5 = inlined_call_operand.hbm [shape: bf16[128,128], index: 5, kind: input, shape index: {}]
  %s6 = inlined_call_operand.hbm [shape: f32[8,128], index: 6, kind: input, shape index: {}]
  %s7 = inlined_call_operand.hbm [shape: f32[8,16,128], index: 7, kind: output, shape index: {}]
  %s8 = sld [smem:[#allocation0]]
  $region89: #{tpu_custom_call.1} parent=0
    _
  %s10 = ssub.s32 1, %s8
  %s11 = scalar_select 0, %s10, %s8
  $region1: #{tpu_custom_call.1} parent=0
    #allocation2 [shape = 'u8[65536]{0}', space=vmem, size = 0x10000, scoped, tag = 'input window, operand 0']
    #allocation3 [shape = 's32[2]{0}', space=sflag, size = 0x8, scoped, tag = 'scoped memory for tpu_custom_call.1']
    #allocation4 [shape = 's32[2]{0}', space=sflag, size = 0x8, scoped, tag = 'scoped memory for tpu_custom_call.1']
    #allocation5 [shape = 'u8[65536]{0}', space=vmem, size = 0x10000, scoped, tag = 'input window, operand 1, single buffered']
    #allocation6 [shape = 's32[1]{0}', space=sflag, size = 0x4, scoped, tag = 'scoped memory for tpu_custom_call.1']
    #allocation7 [shape = 'u8[196608]{0}', space=vmem, size = 0x30000, scoped, tag = 'input window, operand 2, single buffered']
    #allocation8 [shape = 'u8[32768]{0}', space=vmem, size = 0x8000, scoped, tag = 'input window, operand 3, single buffered']
    #allocation9 [shape = 's32[1]{0}', space=sflag, size = 0x4, scoped, tag = 'scoped memory for tpu_custom_call.1']
    #allocation10 [shape = 'u8[65536]{0}', space=vmem, size = 0x10000, scoped, tag = 'input window, operand 4, single buffered']
    #allocation11 [shape = 'u8[32768]{0}', space=vmem, size = 0x8000, scoped, tag = 'input window, operand 5, single buffered']
    #allocation12 [shape = 's32[1]{0}', space=sflag, size = 0x4, scoped, tag = 'scoped memory for tpu_custom_call.1']
    #allocation13 [shape = 'u8[4096]{0}', space=vmem, size = 0x1000, scoped, tag = 'input window, operand 6, single buffered']
    #allocation14 [shape = 'u8[65536]{0}', space=vmem, size = 0x10000, scoped, tag = 'output window, operand 0']
    %12 = vsyncpa [#allocation3], 0
    %s13 = scalar_lea.sflag [#allocation3], 1
    %14 = vsyncpa %s13, 0
    %15 = vsyncpa [#allocation6], 0
    %16 = vsyncpa [#allocation9], 0
    %17 = vsyncpa [#allocation12], 0
    %18 = vsyncpa [#allocation4], 0
    %s19 = scalar_lea.sflag [#allocation4], 1
    %20 = vsyncpa %s19, 0
    loop: start=0, step=1, limit=4
    $region2: #{tpu_custom_call.1} parent=1 // loop_pre_header
      _
    $region3: #{tpu_custom_call.1} parent=1 // loop_header
      %s22 = sphi 0, %s26
      %p23 = scmp.ge.s32.totalorder %s22, 4
      %s32 = sphi 0, %s34
      %s35 = sphi 0, %s32
      %s36 = sphi 0, %s35
      %s52 = sphi 0, %s36
      %s56 = sphi 0, %s56
      %s58 = sphi 0, %s56
      %s59 = sphi 0, %s58
      %s73 = sphi 0, %s59
      %s77 = sphi 0, %s77
      %s79 = sphi 0, %s77
      %s80 = sphi 0, %s79
      %s94 = sphi 0, %s80
      %s98 = sphi 0, %s98
      %s100 = sphi 0, %s98
      %s101 = sphi 0, %s100
      %s115 = sphi 0, %s101
      %s119 = sphi 0, %s119
      %s121 = sphi 0, %s119
      %s122 = sphi 0, %s121
      %s136 = sphi 0, %s122
      %s140 = sphi 0, %s140
      %s142 = sphi 0, %s140
      %s143 = sphi 0, %s142
      %s157 = sphi 0, %s143
      %s161 = sphi 0, %s161
      %s163 = sphi 0, %s161
      %s164 = sphi 0, %s163
      %s178 = sphi 0, %s164
      %s184 = sphi 0, %s186
      %s187 = sphi 0, %s184
      %s188 = sphi 0, %s187
      %s204 = sphi 0, %s188
    $region4: #{tpu_custom_call.1} parent=1 // loop_header_branch
      %25 = sbr.rel (%p23) target = $region8
    $region5: #{tpu_custom_call.1} parent=1 // loop_body
      %s27 = ssub.s32 %s22, 1
      %s28 = ssub.s32 %s22, 2
      %s29 = sadd.s32 %s22, 1
      %s30 = ssub.s32 %s22, %s29
      %p31 = scmp.eq.s32.totalorder %s30, 0
      %s33 = sadd.s32 %s32, 1
      %s34 = scalar_select %p31, %s32, %s33
      %p37 = pneg %p31
      %p38 = scmp.eq.s32.totalorder %s22, 1
      %p39 = por %p37, %p38
      %p40 = scmp.ne.s32.totalorder %s32, %s35
      %p41 = scmp.eq.s32.totalorder %s22, 0
      %p42 = por %p40, %p41
      %p43 = scmp.ne.s32.totalorder %s32, %s35
      %p44 = scmp.eq.s32.totalorder %s27, 1
      %p45 = por %p43, %p44
      %p46 = scmp.ne.s32.totalorder %s35, %s36
      %p47 = scmp.eq.s32.totalorder %s27, 0
      %p48 = por %p46, %p47
      %p49 = scmp.ne.s32.totalorder %s35, %s36
      %p50 = scmp.eq.s32.totalorder %s28, 1
      %p51 = por %p49, %p50
      %p53 = scmp.ne.s32.totalorder %s36, %s52
      %p54 = scmp.eq.s32.totalorder %s28, 0
      %p55 = por %p53, %p54
      %s57 = sadd.s32 %s56, 1
      %p60 = scmp.eq.s32.totalorder %s22, 1
      %p61 = scmp.ne.s32.totalorder %s56, %s58
      %p62 = scmp.eq.s32.totalorder %s22, 0
      %p63 = por %p61, %p62
      %p64 = scmp.ne.s32.totalorder %s56, %s58
      %p65 = scmp.eq.s32.totalorder %s27, 1
      %p66 = por %p64, %p65
      %p67 = scmp.ne.s32.totalorder %s58, %s59
      %p68 = scmp.eq.s32.totalorder %s27, 0
      %p69 = por %p67, %p68
      %p70 = scmp.ne.s32.totalorder %s58, %s59
      %p71 = scmp.eq.s32.totalorder %s28, 1
      %p72 = por %p70, %p71
      %p74 = scmp.ne.s32.totalorder %s59, %s73
      %p75 = scmp.eq.s32.totalorder %s28, 0
      %p76 = por %p74, %p75
      %s78 = sadd.s32 %s77, 1
      %p81 = scmp.eq.s32.totalorder %s22, 1
      %p82 = scmp.ne.s32.totalorder %s77, %s79
      %p83 = scmp.eq.s32.totalorder %s22, 0
      %p84 = por %p82, %p83
      %p85 = scmp.ne.s32.totalorder %s77, %s79
      %p86 = scmp.eq.s32.totalorder %s27, 1
      %p87 = por %p85, %p86
      %p88 = scmp.ne.s32.totalorder %s79, %s80
      %p89 = scmp.eq.s32.totalorder %s27, 0
      %p90 = por %p88, %p89
      %p91 = scmp.ne.s32.totalorder %s79, %s80
      %p92 = scmp.eq.s32.totalorder %s28, 1
      %p93 = por %p91, %p92
      %p95 = scmp.ne.s32.totalorder %s80, %s94
      %p96 = scmp.eq.s32.totalorder %s28, 0
      %p97 = por %p95, %p96
      %s99 = sadd.s32 %s98, 1
      %p102 = scmp.eq.s32.totalorder %s22, 1
      %p103 = scmp.ne.s32.totalorder %s98, %s100
      %p104 = scmp.eq.s32.totalorder %s22, 0
      %p105 = por %p103, %p104
      %p106 = scmp.ne.s32.totalorder %s98, %s100
      %p107 = scmp.eq.s32.totalorder %s27, 1
      %p108 = por %p106, %p107
      %p109 = scmp.ne.s32.totalorder %s100, %s101
      %p110 = scmp.eq.s32.totalorder %s27, 0
      %p111 = por %p109, %p110
      %p112 = scmp.ne.s32.totalorder %s100, %s101
      %p113 = scmp.eq.s32.totalorder %s28, 1
      %p114 = por %p112, %p113
      %p116 = scmp.ne.s32.totalorder %s101, %s115
      %p117 = scmp.eq.s32.totalorder %s28, 0
      %p118 = por %p116, %p117
      %s120 = sadd.s32 %s119, 1
      %p123 = scmp.eq.s32.totalorder %s22, 1
      %p124 = scmp.ne.s32.totalorder %s119, %s121
      %p125 = scmp.eq.s32.totalorder %s22, 0
      %p126 = por %p124, %p125
      %p127 = scmp.ne.s32.totalorder %s119, %s121
      %p128 = scmp.eq.s32.totalorder %s27, 1
      %p129 = por %p127, %p128
      %p130 = scmp.ne.s32.totalorder %s121, %s122
      %p131 = scmp.eq.s32.totalorder %s27, 0
      %p132 = por %p130, %p131
      %p133 = scmp.ne.s32.totalorder %s121, %s122
      %p134 = scmp.eq.s32.totalorder %s28, 1
      %p135 = por %p133, %p134
      %p137 = scmp.ne.s32.totalorder %s122, %s136
      %p138 = scmp.eq.s32.totalorder %s28, 0
      %p139 = por %p137, %p138
      %s141 = sadd.s32 %s140, 1
      %p144 = scmp.eq.s32.totalorder %s22, 1
      %p145 = scmp.ne.s32.totalorder %s140, %s142
      %p146 = scmp.eq.s32.totalorder %s22, 0
      %p147 = por %p145, %p146
      %p148 = scmp.ne.s32.totalorder %s140, %s142
      %p149 = scmp.eq.s32.totalorder %s27, 1
      %p150 = por %p148, %p149
      %p151 = scmp.ne.s32.totalorder %s142, %s143
      %p152 = scmp.eq.s32.totalorder %s27, 0
      %p153 = por %p151, %p152
      %p154 = scmp.ne.s32.totalorder %s142, %s143
      %p155 = scmp.eq.s32.totalorder %s28, 1
      %p156 = por %p154, %p155
      %p158 = scmp.ne.s32.totalorder %s143, %s157
      %p159 = scmp.eq.s32.totalorder %s28, 0
      %p160 = por %p158, %p159
      %s162 = sadd.s32 %s161, 1
      %p165 = scmp.eq.s32.totalorder %s22, 1
      %p166 = scmp.ne.s32.totalorder %s161, %s163
      %p167 = scmp.eq.s32.totalorder %s22, 0
      %p168 = por %p166, %p167
      %p169 = scmp.ne.s32.totalorder %s161, %s163
      %p170 = scmp.eq.s32.totalorder %s27, 1
      %p171 = por %p169, %p170
      %p172 = scmp.ne.s32.totalorder %s163, %s164
      %p173 = scmp.eq.s32.totalorder %s27, 0
      %p174 = por %p172, %p173
      %p175 = scmp.ne.s32.totalorder %s163, %s164
      %p176 = scmp.eq.s32.totalorder %s28, 1
      %p177 = por %p175, %p176
      %p179 = scmp.ne.s32.totalorder %s164, %s178
      %p180 = scmp.eq.s32.totalorder %s28, 0
      %p181 = por %p179, %p180
      %s182 = ssub.s32 %s22, %s29
      %p183 = scmp.eq.s32.totalorder %s182, 0
      %s185 = sadd.s32 %s184, 1
      %s186 = scalar_select %p183, %s184, %s185
      %p189 = pneg %p183
      %p190 = scmp.eq.s32.totalorder %s22, 1
      %p191 = por %p189, %p190
      %p192 = scmp.ne.s32.totalorder %s184, %s187
      %p193 = scmp.eq.s32.totalorder %s22, 0
      %p194 = por %p192, %p193
      %p195 = scmp.ne.s32.totalorder %s184, %s187
      %p196 = scmp.eq.s32.totalorder %s27, 1
      %p197 = por %p195, %p196
      %p198 = scmp.ne.s32.totalorder %s187, %s188
      %p199 = scmp.eq.s32.totalorder %s27, 0
      %p200 = por %p198, %p199
      %p201 = scmp.ne.s32.totalorder %s187, %s188
      %p202 = scmp.eq.s32.totalorder %s28, 1
      %p203 = por %p201, %p202
      %p205 = scmp.ne.s32.totalorder %s188, %s204
      %p206 = scmp.eq.s32.totalorder %s28, 0
      %p207 = por %p205, %p206
      %p208 = scmp.le.s32.totalorder 1, %s22
      %p209 = scmp.lt.s32.totalorder %s22, 3
      %p210 = pnand %p208, %p209
      %p211 = pneg %p210
      // Predicated region
      $region9: #{tpu_custom_call.1} parent=5 // pred_check
        _
      $region10: #{tpu_custom_call.1} parent=5 // pred_check_branch
        %213 = sbr.rel (%p210) target = $region12
      $region11: #{tpu_custom_call.1} parent=5 // pred_region
        %s214 = ssub.s32 %s22, 1
        // Predicated region
        $region13: #{tpu_custom_call.1} parent=11 // pred_check
          %p215 = pneg %p69
        $region14: #{tpu_custom_call.1} parent=11 // pred_check_branch
          %217 = sbr.rel (%p215) target = $region16
        $region15: #{tpu_custom_call.1} parent=11 // pred_region
          %219 = vsyncadd [#allocation6], 0
          %s220 = sshll.u32 %s1, 4
          %s221 = int_to_ptr.hbm [resolvable:$true] %s220
          %s222 = sshll.u32 [#allocation5], 4
          %s223 = int_to_ptr.vmem [resolvable:$true] %s222
          %228 = dma.hbm_to_vmem [thread:$0]  %s221, 2048, %s223, [#allocation6], 128, 128, 8
        $region16: #{tpu_custom_call.1} parent=11 // pred_fallthru
          _
        // Predicated region
        $region17: #{tpu_custom_call.1} parent=11 // pred_check
          %p229 = pneg %p90
        $region18: #{tpu_custom_call.1} parent=11 // pred_check_branch
          %231 = sbr.rel (%p229) target = $region20
        $region19: #{tpu_custom_call.1} parent=11 // pred_region
          %233 = vsyncadd [#allocation6], 0
          %s234 = sshll.u32 %s2, 4
          %s235 = int_to_ptr.hbm [resolvable:$true] %s234
          %s236 = sshll.u32 [#allocation7], 4
          %s237 = int_to_ptr.vmem [resolvable:$true] %s236
          %242 = dma.hbm_to_vmem [thread:$0]  %s235, 6144, %s237, [#allocation6], 384, 384, 24
        $region20: #{tpu_custom_call.1} parent=11 // pred_fallthru
          _
        // Predicated region
        $region21: #{tpu_custom_call.1} parent=11 // pred_check
          %p243 = pneg %p111
        $region22: #{tpu_custom_call.1} parent=11 // pred_check_branch
          %245 = sbr.rel (%p243) target = $region24
        $region23: #{tpu_custom_call.1} parent=11 // pred_region
          %247 = vsyncadd [#allocation9], 0
          %s248 = sshll.u32 %s3, 4
          %s249 = int_to_ptr.hbm [resolvable:$true] %s248
          %s250 = sshll.u32 [#allocation8], 4
          %s251 = int_to_ptr.vmem [resolvable:$true] %s250
          %256 = dma.hbm_to_vmem [thread:$0]  %s249, 1024, %s251, [#allocation9], 64, 64, 4
        $region24: #{tpu_custom_call.1} parent=11 // pred_fallthru
          _
        // Predicated region
        $region25: #{tpu_custom_call.1} parent=11 // pred_check
          %p257 = pneg %p132
        $region26: #{tpu_custom_call.1} parent=11 // pred_check_branch
          %259 = sbr.rel (%p257) target = $region28
        $region27: #{tpu_custom_call.1} parent=11 // pred_region
          %261 = vsyncadd [#allocation9], 0
          %s262 = sshll.u32 %s4, 4
          %s263 = int_to_ptr.hbm [resolvable:$true] %s262
          %s264 = sshll.u32 [#allocation10], 4
          %s265 = int_to_ptr.vmem [resolvable:$true] %s264
          %270 = dma.hbm_to_vmem [thread:$0]  %s263, 2048, %s265, [#allocation9], 128, 128, 8
        $region28: #{tpu_custom_call.1} parent=11 // pred_fallthru
          _
        // Predicated region
        $region29: #{tpu_custom_call.1} parent=11 // pred_check
          %p271 = pneg %p153
        $region30: #{tpu_custom_call.1} parent=11 // pred_check_branch
          %273 = sbr.rel (%p271) target = $region32
        $region31: #{tpu_custom_call.1} parent=11 // pred_region
          %275 = vsyncadd [#allocation12], 0
          %s276 = sshll.u32 %s5, 4
          %s277 = int_to_ptr.hbm [resolvable:$true] %s276
          %s278 = sshll.u32 [#allocation11], 4
          %s279 = int_to_ptr.vmem [resolvable:$true] %s278
          %284 = dma.hbm_to_vmem [thread:$0]  %s277, 1024, %s279, [#allocation12], 64, 64, 4
        $region32: #{tpu_custom_call.1} parent=11 // pred_fallthru
          _
        // Predicated region
        $region33: #{tpu_custom_call.1} parent=11 // pred_check
          %p285 = pneg %p174
        $region34: #{tpu_custom_call.1} parent=11 // pred_check_branch
          %287 = sbr.rel (%p285) target = $region36
        $region35: #{tpu_custom_call.1} parent=11 // pred_region
          %289 = vsyncadd [#allocation12], 0
          %s291 = sshll.u32 %s6, 4
          %s292 = int_to_ptr.hbm [resolvable:$true] %s291
          %s293 = sshll.u32 [#allocation13], 4
          %s294 = int_to_ptr.vmem [resolvable:$true] %s293
          %296 = dma.hbm_to_vmem [thread:$0]  %s292, 128, %s294, [#allocation12]
        $region36: #{tpu_custom_call.1} parent=11 // pred_fallthru
          _
      $region12: #{tpu_custom_call.1} parent=5 // pred_fallthru
        _
      %p297 = scmp.lt.s32.totalorder %s22, 2
      // Predicated region
      $region37: #{tpu_custom_call.1} parent=5 // pred_check
        %p298 = pneg %p297
      $region38: #{tpu_custom_call.1} parent=5 // pred_check_branch
        %300 = sbr.rel (%p298) target = $region40
      $region39: #{tpu_custom_call.1} parent=5 // pred_region
        // Predicated region
        $region41: #{tpu_custom_call.1} parent=39 // pred_check
          %p301 = pneg %p42
        $region42: #{tpu_custom_call.1} parent=39 // pred_check_branch
          %303 = sbr.rel (%p301) target = $region44
        $region43: #{tpu_custom_call.1} parent=39 // pred_region
          %s304 = sand.u32 %s32, 1
          %s305 = scalar_lea.sflag [#allocation3], %s304
          %s306 = sand.u32 %s32, 1
          %s307 = smul.addr %s306, 64
          %s308 = scalar_lea.vmem [#allocation2], %s307
          %s309 = smul.u32 4, %s22
          %311 = vsyncadd %s305, 0
          %s312 = smul.addr %s309, 2
          %s313 = smul.addr %s312, 8
          %s314 = scalar_lea.hbm %s0, %s313
          %s315 = sshll.u32 %s314, 4
          %s316 = int_to_ptr.hbm [resolvable:$true] %s315
          %s317 = sshll.u32 %s308, 4
          %s318 = int_to_ptr.vmem [resolvable:$true] %s317
          %323 = dma.hbm_to_vmem [thread:$0]  %s316, 1024, %s318, %s305, 128, 128, 8
        $region44: #{tpu_custom_call.1} parent=39 // pred_fallthru
          _
      $region40: #{tpu_custom_call.1} parent=5 // pred_fallthru
        _
      %p324 = scmp.le.s32.totalorder 1, %s22
      %p325 = scmp.lt.s32.totalorder %s22, 3
      %p326 = pnand %p324, %p325
      %p327 = pneg %p326
      // Predicated region
      $region45: #{tpu_custom_call.1} parent=5 // pred_check
        _
      $region46: #{tpu_custom_call.1} parent=5 // pred_check_branch
        %329 = sbr.rel (%p326) target = $region48
      $region47: #{tpu_custom_call.1} parent=5 // pred_region
        %s330 = ssub.s32 %s22, 1
        %s331 = sand.u32 %s35, 1
        %s332 = scalar_lea.sflag [#allocation3], %s331
        %s333 = sand.u32 %s35, 1
        %s334 = smul.addr %s333, 64
        %s335 = scalar_lea.vmem [#allocation2], %s334
        // Predicated region
        $region49: #{tpu_custom_call.1} parent=47 // pred_check
          %p336 = pneg %p48
        $region50: #{tpu_custom_call.1} parent=47 // pred_check_branch
          %338 = sbr.rel (%p336) target = $region52
        $region51: #{tpu_custom_call.1} parent=47 // pred_region
          %340 = dma.done %s332, 1024
        $region52: #{tpu_custom_call.1} parent=47 // pred_fallthru
          _
        // Predicated region
        $region53: #{tpu_custom_call.1} parent=47 // pred_check
          %p341 = pneg %p69
        $region54: #{tpu_custom_call.1} parent=47 // pred_check_branch
          %343 = sbr.rel (%p341) target = $region56
        $region55: #{tpu_custom_call.1} parent=47 // pred_region
          %345 = dma.done [#allocation6], 2048
        $region56: #{tpu_custom_call.1} parent=47 // pred_fallthru
          _
        // Predicated region
        $region57: #{tpu_custom_call.1} parent=47 // pred_check
          %p346 = pneg %p90
        $region58: #{tpu_custom_call.1} parent=47 // pred_check_branch
          %348 = sbr.rel (%p346) target = $region60
        $region59: #{tpu_custom_call.1} parent=47 // pred_region
          %350 = dma.done [#allocation6], 6144
        $region60: #{tpu_custom_call.1} parent=47 // pred_fallthru
          _
        // Predicated region
        $region61: #{tpu_custom_call.1} parent=47 // pred_check
          %p351 = pneg %p111
        $region62: #{tpu_custom_call.1} parent=47 // pred_check_branch
          %353 = sbr.rel (%p351) target = $region64
        $region63: #{tpu_custom_call.1} parent=47 // pred_region
          %355 = dma.done [#allocation9], 1024
        $region64: #{tpu_custom_call.1} parent=47 // pred_fallthru
          _
        // Predicated region
        $region65: #{tpu_custom_call.1} parent=47 // pred_check
          %p356 = pneg %p132
        $region66: #{tpu_custom_call.1} parent=47 // pred_check_branch
          %358 = sbr.rel (%p356) target = $region68
        $region67: #{tpu_custom_call.1} parent=47 // pred_region
          %360 = dma.done [#allocation9], 2048
        $region68: #{tpu_custom_call.1} parent=47 // pred_fallthru
          _
        // Predicated region
        $region69: #{tpu_custom_call.1} parent=47 // pred_check
          %p361 = pneg %p153
        $region70: #{tpu_custom_call.1} parent=47 // pred_check_branch
          %363 = sbr.rel (%p361) target = $region72
        $region71: #{tpu_custom_call.1} parent=47 // pred_region
          %365 = dma.done [#allocation12], 1024
        $region72: #{tpu_custom_call.1} parent=47 // pred_fallthru
          _
        // Predicated region
        $region73: #{tpu_custom_call.1} parent=47 // pred_check
          %p366 = pneg %p174
        $region74: #{tpu_custom_call.1} parent=47 // pred_check_branch
          %368 = sbr.rel (%p366) target = $region76
        $region75: #{tpu_custom_call.1} parent=47 // pred_region
          %370 = dma.done [#allocation12], 128
        $region76: #{tpu_custom_call.1} parent=47 // pred_fallthru
          _
        %s371 = sand.u32 %s35, 1
        %s372 = scalar_lea.sflag [#allocation3], %s371
        %s373 = sand.u32 %s35, 1
        %s374 = smul.addr %s373, 64
        %s375 = scalar_lea.vmem [#allocation2], %s374
        %p376 = pneg %p48
        %p377 = pneg %p45
        %p378 = pneg %p69
        %p379 = pneg %p66
        %p380 = pneg %p90
        %p381 = pneg %p87
        %p382 = pneg %p111
        %p383 = pneg %p108
        %p384 = pneg %p132
        %p385 = pneg %p129
        %p386 = pneg %p153
        %p387 = pneg %p150
        %p388 = pneg %p174
        %p389 = pneg %p171
        %p390 = pneg %p200
        %p391 = pneg %p197
        %s392 = sand.u32 %s187, 1
        %s393 = scalar_lea.sflag [#allocation4], %s392
        %s394 = sand.u32 %s187, 1
        %s395 = smul.addr %s394, 64
        %s396 = scalar_lea.vmem [#allocation14], %s395
        %s397 = smul.u32 4, %s27
        %s398 = smul.u32 4, %s27
        %v399 = vld [vmem:[%s335] sm:$0xff]
        %v400 = vld [vmem:[%s335 + $0x8] sm:$0xff]
        %v401 = vld [vmem:[%s335 + $0x10] sm:$0xff]
        %v402 = vld [vmem:[%s335 + $0x18] sm:$0xff]
        %v403 = vld [vmem:[%s335 + $0x20] sm:$0xff]
        %v404 = vld [vmem:[%s335 + $0x28] sm:$0xff]
        %v405 = vld [vmem:[%s335 + $0x30] sm:$0xff]
        %v406 = vld [vmem:[%s335 + $0x38] sm:$0xff]
        %v407 = vpack.c.bf16 %v400, %v399
        %v408 = vpack.c.bf16 %v402, %v401
        %v409 = vpack.c.bf16 %v404, %v403
        %v410 = vpack.c.bf16 %v406, %v405
        %v411 = vld [vmem:[#allocation5] sm:$0xff]
        %v412 = vld [vmem:[#allocation5 + $0x8] sm:$0xff]
        %v413 = vld [vmem:[#allocation5 + $0x10] sm:$0xff]
        %v414 = vld [vmem:[#allocation5 + $0x18] sm:$0xff]
        %v415 = vld [vmem:[#allocation5 + $0x20] sm:$0xff]
        %v416 = vld [vmem:[#allocation5 + $0x28] sm:$0xff]
        %v417 = vld [vmem:[#allocation5 + $0x30] sm:$0xff]
        %v418 = vld [vmem:[#allocation5 + $0x38] sm:$0xff]
        %v419 = vld [vmem:[#allocation5 + $0x40] sm:$0xff]
        %v420 = vld [vmem:[#allocation5 + $0x48] sm:$0xff]
        %v421 = vld [vmem:[#allocation5 + $0x50] sm:$0xff]
        %v422 = vld [vmem:[#allocation5 + $0x58] sm:$0xff]
        %v423 = vld [vmem:[#allocation5 + $0x60] sm:$0xff]
        %v424 = vld [vmem:[#allocation5 + $0x68] sm:$0xff]
        %v425 = vld [vmem:[#allocation5 + $0x70] sm:$0xff]
        %v426 = vld [vmem:[#allocation5 + $0x78] sm:$0xff]
        %v443 = vunpack.c.l.b16 %v411
        %v444 = vunpack.c.h.b16 %v411
        %v445 = vunpack.c.l.b16 %v412
        %v446 = vunpack.c.h.b16 %v412
        %v447 = vunpack.c.l.b16 %v413
        %v448 = vunpack.c.h.b16 %v413
        %v449 = vunpack.c.l.b16 %v414
        %v450 = vunpack.c.h.b16 %v414
        %v451 = vunpack.c.l.b16 %v415
        %v452 = vunpack.c.h.b16 %v415
        %v453 = vunpack.c.l.b16 %v416
        %v454 = vunpack.c.h.b16 %v416
        %v455 = vunpack.c.l.b16 %v417
        %v456 = vunpack.c.h.b16 %v417
        %v457 = vunpack.c.l.b16 %v418
        %v458 = vunpack.c.h.b16 %v418
        %v459 = vunpack.c.l.b16 %v419
        %v460 = vunpack.c.h.b16 %v419
        %v461 = vunpack.c.l.b16 %v420
        %v462 = vunpack.c.h.b16 %v420
        %v463 = vunpack.c.l.b16 %v421
        %v464 = vunpack.c.h.b16 %v421
        %v465 = vunpack.c.l.b16 %v422
        %v466 = vunpack.c.h.b16 %v422
        %v467 = vunpack.c.l.b16 %v423
        %v468 = vunpack.c.h.b16 %v423
        %v469 = vunpack.c.l.b16 %v424
        %v470 = vunpack.c.h.b16 %v424
        %v471 = vunpack.c.l.b16 %v425
        %v472 = vunpack.c.h.b16 %v425
        %v473 = vunpack.c.l.b16 %v426
        %v474 = vunpack.c.h.b16 %v426
        %v475 = vpack.c.b16 %v445, %v443
        %v476 = vpack.c.b16 %v446, %v444
        %v477 = vpack.c.b16 %v449, %v447
        %v478 = vpack.c.b16 %v450, %v448
        %v479 = vpack.c.b16 %v453, %v451
        %v480 = vpack.c.b16 %v454, %v452
        %v481 = vpack.c.b16 %v457, %v455
        %v482 = vpack.c.b16 %v458, %v456
        %v483 = vpack.c.b16 %v461, %v459
        %v484 = vpack.c.b16 %v462, %v460
        %v485 = vpack.c.b16 %v465, %v463
        %v486 = vpack.c.b16 %v466, %v464
        %v487 = vpack.c.b16 %v469, %v467
        %v488 = vpack.c.b16 %v470, %v468
        %v489 = vpack.c.b16 %v473, %v471
        %v490 = vpack.c.b16 %v474, %v472
        %507 = vmatpush.bf16.msra.mxu0 %v489
        %508 = vmatpush.bf16.msra.mxu0 %v487
        %509 = vmatpush.bf16.msra.mxu0 %v485
        %510 = vmatpush.bf16.msra.mxu0 %v483
        %511 = vmatpush.bf16.msra.mxu0 %v481
        %512 = vmatpush.bf16.msra.mxu0 %v479
        %513 = vmatpush.bf16.msra.mxu0 %v477
        %514 = vmatpush.bf16.msra.mxu0 %v475
        %515 = vmatmul.bf16.gmra.mxu0 %v407
        %v516 = vpop.f32.mrf.mxu0
        %v517 = vadd.f32 0.0, %v516
        %v518 = vpop.f32.mrf.mxu0
        %v519 = vadd.f32 0.0, %v518
        %520 = vmatmul.bf16.gmra.mxu0 %v408
        %v521 = vpop.f32.mrf.mxu0
        %v522 = vadd.f32 0.0, %v521
        %v523 = vpop.f32.mrf.mxu0
        %v524 = vadd.f32 0.0, %v523
        %525 = vmatmul.bf16.gmra.mxu0 %v409
        %v526 = vpop.f32.mrf.mxu0
        %v527 = vadd.f32 0.0, %v526
        %v528 = vpop.f32.mrf.mxu0
        %v529 = vadd.f32 0.0, %v528
        %530 = vmatmul.bf16.gmra.mxu0 %v410
        %v531 = vpop.f32.mrf.mxu0
        %v532 = vadd.f32 0.0, %v531
        %v533 = vpop.f32.mrf.mxu0
        %v534 = vadd.f32 0.0, %v533
        %535 = vdwg.mxu0
        %536 = vmatpush.bf16.msra.mxu0 %v490
        %537 = vmatpush.bf16.msra.mxu0 %v488
        %538 = vmatpush.bf16.msra.mxu0 %v486
        %539 = vmatpush.bf16.msra.mxu0 %v484
        %540 = vmatpush.bf16.msra.mxu0 %v482
        %541 = vmatpush.bf16.msra.mxu0 %v480
        %542 = vmatpush.bf16.msra.mxu0 %v478
        %543 = vmatpush.bf16.msra.mxu0 %v476
        %544 = vmatmul.bf16.gmra.mxu0 %v407
        %v545 = vpop.f32.mrf.mxu0
        %v546 = vadd.f32 0.0, %v545
        %v547 = vpop.f32.mrf.mxu0
        %v548 = vadd.f32 0.0, %v547
        %549 = vmatmul.bf16.gmra.mxu0 %v408
        %v550 = vpop.f32.mrf.mxu0
        %v551 = vadd.f32 0.0, %v550
        %v552 = vpop.f32.mrf.mxu0
        %v553 = vadd.f32 0.0, %v552
        %554 = vmatmul.bf16.gmra.mxu0 %v409
        %v555 = vpop.f32.mrf.mxu0
        %v556 = vadd.f32 0.0, %v555
        %v557 = vpop.f32.mrf.mxu0
        %v558 = vadd.f32 0.0, %v557
        %559 = vmatmul.bf16.gmra.mxu0 %v410
        %v560 = vpop.f32.mrf.mxu0
        %v561 = vadd.f32 0.0, %v560
        %v562 = vpop.f32.mrf.mxu0
        %v563 = vadd.f32 0.0, %v562
        %564 = vdwg.mxu0
        %v565 = vld [vmem:[#allocation13] sm:$0x1]
        %v566 = vperm.slane %v565, 0
        %v567 = vadd.f32 %v517, %v566
        %v568 = vadd.f32 %v519, %v566
        %v569 = vadd.f32 %v522, %v566
        %v570 = vadd.f32 %v524, %v566
        %v571 = vadd.f32 %v527, %v566
        %v572 = vadd.f32 %v529, %v566
        %v573 = vadd.f32 %v532, %v566
        %v574 = vadd.f32 %v534, %v566
        %v575 = vadd.f32 %v567, 3.0
        %v576 = vadd.f32 %v568, 3.0
        %v577 = vadd.f32 %v569, 3.0
        %v578 = vadd.f32 %v570, 3.0
        %v579 = vadd.f32 %v571, 3.0
        %v580 = vadd.f32 %v572, 3.0
        %v581 = vadd.f32 %v573, 3.0
        %v582 = vadd.f32 %v574, 3.0
        %v583 = vmax.f32 %v575, 0.0
        %v584 = vmax.f32 %v576, 0.0
        %v585 = vmax.f32 %v577, 0.0
        %v586 = vmax.f32 %v578, 0.0
        %v587 = vmax.f32 %v579, 0.0
        %v588 = vmax.f32 %v580, 0.0
        %v589 = vmax.f32 %v581, 0.0
        %v590 = vmax.f32 %v582, 0.0
        %v591 = vmin.f32 %v583, 6.0
        %v592 = vmin.f32 %v584, 6.0
        %v593 = vmin.f32 %v585, 6.0
        %v594 = vmin.f32 %v586, 6.0
        %v595 = vmin.f32 %v587, 6.0
        %v596 = vmin.f32 %v588, 6.0
        %v597 = vmin.f32 %v589, 6.0
        %v598 = vmin.f32 %v590, 6.0
        %v599 = vmul.f32 %v567, %v591
        %v600 = vmul.f32 %v568, %v592
        %v601 = vmul.f32 %v569, %v593
        %v602 = vmul.f32 %v570, %v594
        %v603 = vmul.f32 %v571, %v595
        %v604 = vmul.f32 %v572, %v596
        %v605 = vmul.f32 %v573, %v597
        %v606 = vmul.f32 %v574, %v598
        %v607 = vmul.f32 %v599, 0.16666667
        %v608 = vmul.f32 %v600, 0.16666667
        %v609 = vmul.f32 %v601, 0.16666667
        %v610 = vmul.f32 %v602, 0.16666667
        %v611 = vmul.f32 %v603, 0.16666667
        %v612 = vmul.f32 %v604, 0.16666667
        %v613 = vmul.f32 %v605, 0.16666667
        %v614 = vmul.f32 %v606, 0.16666667
        %v615 = vld [vmem:[#allocation13 + $0x1] sm:$0x1]
        %v616 = vperm.slane %v615, 0
        %v617 = vadd.f32 %v546, %v616
        %v618 = vadd.f32 %v548, %v616
        %v619 = vadd.f32 %v551, %v616
        %v620 = vadd.f32 %v553, %v616
        %v621 = vadd.f32 %v556, %v616
        %v622 = vadd.f32 %v558, %v616
        %v623 = vadd.f32 %v561, %v616
        %v624 = vadd.f32 %v563, %v616
        %v625 = vpack.c.bf16 %v608, %v607
        %v626 = vpack.c.bf16 %v610, %v609
        %v627 = vpack.c.bf16 %v612, %v611
        %v628 = vpack.c.bf16 %v614, %v613
        %v629 = vld [vmem:[#allocation7] sm:$0xff]
        %v630 = vld [vmem:[#allocation7 + $0x8] sm:$0xff]
        %v631 = vld [vmem:[#allocation7 + $0x10] sm:$0xff]
        %v632 = vld [vmem:[#allocation7 + $0x18] sm:$0xff]
        %v633 = vld [vmem:[#allocation7 + $0x20] sm:$0xff]
        %v634 = vld [vmem:[#allocation7 + $0x28] sm:$0xff]
        %v635 = vld [vmem:[#allocation7 + $0x30] sm:$0xff]
        %v636 = vld [vmem:[#allocation7 + $0x38] sm:$0xff]
        %v637 = vld [vmem:[#allocation7 + $0x40] sm:$0xff]
        %v638 = vld [vmem:[#allocation7 + $0x48] sm:$0xff]
        %v639 = vld [vmem:[#allocation7 + $0x50] sm:$0xff]
        %v640 = vld [vmem:[#allocation7 + $0x58] sm:$0xff]
        %v641 = vld [vmem:[#allocation7 + $0x60] sm:$0xff]
        %v642 = vld [vmem:[#allocation7 + $0x68] sm:$0xff]
        %v643 = vld [vmem:[#allocation7 + $0x70] sm:$0xff]
        %v644 = vld [vmem:[#allocation7 + $0x78] sm:$0xff]
        %v645 = vld [vmem:[#allocation7 + $0x80] sm:$0xff]
        %v646 = vld [vmem:[#allocation7 + $0x88] sm:$0xff]
        %v647 = vld [vmem:[#allocation7 + $0x90] sm:$0xff]
        %v648 = vld [vmem:[#allocation7 + $0x98] sm:$0xff]
        %v649 = vld [vmem:[#allocation7 + $0xa0] sm:$0xff]
        %v650 = vld [vmem:[#allocation7 + $0xa8] sm:$0xff]
        %v651 = vld [vmem:[#allocation7 + $0xb0] sm:$0xff]
        %v652 = vld [vmem:[#allocation7 + $0xb8] sm:$0xff]
        %v653 = vld [vmem:[#allocation7 + $0xc0] sm:$0xff]
        %v654 = vld [vmem:[#allocation7 + $0xc8] sm:$0xff]
        %v655 = vld [vmem:[#allocation7 + $0xd0] sm:$0xff]
        %v656 = vld [vmem:[#allocation7 + $0xd8] sm:$0xff]
        %v657 = vld [vmem:[#allocation7 + $0xe0] sm:$0xff]
        %v658 = vld [vmem:[#allocation7 + $0xe8] sm:$0xff]
        %v659 = vld [vmem:[#allocation7 + $0xf0] sm:$0xff]
        %v660 = vld [vmem:[#allocation7 + $0xf8] sm:$0xff]
        %v661 = vld [vmem:[#allocation7 + $0x100] sm:$0xff]
        %v662 = vld [vmem:[#allocation7 + $0x108] sm:$0xff]
        %v663 = vld [vmem:[#allocation7 + $0x110] sm:$0xff]
        %v664 = vld [vmem:[#allocation7 + $0x118] sm:$0xff]
        %v665 = vld [vmem:[#allocation7 + $0x120] sm:$0xff]
        %v666 = vld [vmem:[#allocation7 + $0x128] sm:$0xff]
        %v667 = vld [vmem:[#allocation7 + $0x130] sm:$0xff]
        %v668 = vld [vmem:[#allocation7 + $0x138] sm:$0xff]
        %v669 = vld [vmem:[#allocation7 + $0x140] sm:$0xff]
        %v670 = vld [vmem:[#allocation7 + $0x148] sm:$0xff]
        %v671 = vld [vmem:[#allocation7 + $0x150] sm:$0xff]
        %v672 = vld [vmem:[#allocation7 + $0x158] sm:$0xff]
        %v673 = vld [vmem:[#allocation7 + $0x160] sm:$0xff]
        %v674 = vld [vmem:[#allocation7 + $0x168] sm:$0xff]
        %v675 = vld [vmem:[#allocation7 + $0x170] sm:$0xff]
        %v676 = vld [vmem:[#allocation7 + $0x178] sm:$0xff]
        %v725 = vunpack.c.l.b16 %v629
        %v726 = vunpack.c.h.b16 %v629
        %v727 = vunpack.c.l.b16 %v630
        %v728 = vunpack.c.h.b16 %v630
        %v729 = vunpack.c.l.b16 %v631
        %v730 = vunpack.c.h.b16 %v631
        %v731 = vunpack.c.l.b16 %v632
        %v732 = vunpack.c.h.b16 %v632
        %v733 = vunpack.c.l.b16 %v633
        %v734 = vunpack.c.h.b16 %v633
        %v735 = vunpack.c.l.b16 %v634
        %v736 = vunpack.c.h.b16 %v634
        %v737 = vunpack.c.l.b16 %v635
        %v738 = vunpack.c.h.b16 %v635
        %v739 = vunpack.c.l.b16 %v636
        %v740 = vunpack.c.h.b16 %v636
        %v741 = vunpack.c.l.b16 %v637
        %v742 = vunpack.c.h.b16 %v637
        %v743 = vunpack.c.l.b16 %v638
        %v744 = vunpack.c.h.b16 %v638
        %v745 = vunpack.c.l.b16 %v639
        %v746 = vunpack.c.h.b16 %v639
        %v747 = vunpack.c.l.b16 %v640
        %v748 = vunpack.c.h.b16 %v640
        %v749 = vunpack.c.l.b16 %v641
        %v750 = vunpack.c.h.b16 %v641
        %v751 = vunpack.c.l.b16 %v642
        %v752 = vunpack.c.h.b16 %v642
        %v753 = vunpack.c.l.b16 %v643
        %v754 = vunpack.c.h.b16 %v643
        %v755 = vunpack.c.l.b16 %v644
        %v756 = vunpack.c.h.b16 %v644
        %v757 = vunpack.c.l.b16 %v645
        %v758 = vunpack.c.h.b16 %v645
        %v759 = vunpack.c.l.b16 %v646
        %v760 = vunpack.c.h.b16 %v646
        %v761 = vunpack.c.l.b16 %v647
        %v762 = vunpack.c.h.b16 %v647
        %v763 = vunpack.c.l.b16 %v648
        %v764 = vunpack.c.h.b16 %v648
        %v765 = vunpack.c.l.b16 %v649
        %v766 = vunpack.c.h.b16 %v649
        %v767 = vunpack.c.l.b16 %v650
        %v768 = vunpack.c.h.b16 %v650
        %v769 = vunpack.c.l.b16 %v651
        %v770 = vunpack.c.h.b16 %v651
        %v771 = vunpack.c.l.b16 %v652
        %v772 = vunpack.c.h.b16 %v652
        %v773 = vunpack.c.l.b16 %v653
        %v774 = vunpack.c.h.b16 %v653
        %v775 = vunpack.c.l.b16 %v654
        %v776 = vunpack.c.h.b16 %v654
        %v777 = vunpack.c.l.b16 %v655
        %v778 = vunpack.c.h.b16 %v655
        %v779 = vunpack.c.l.b16 %v656
        %v780 = vunpack.c.h.b16 %v656
        %v781 = vunpack.c.l.b16 %v657
        %v782 = vunpack.c.h.b16 %v657
        %v783 = vunpack.c.l.b16 %v658
        %v784 = vunpack.c.h.b16 %v658
        %v785 = vunpack.c.l.b16 %v659
        %v786 = vunpack.c.h.b16 %v659
        %v787 = vunpack.c.l.b16 %v660
        %v788 = vunpack.c.h.b16 %v660
        %v789 = vunpack.c.l.b16 %v661
        %v790 = vunpack.c.h.b16 %v661
        %v791 = vunpack.c.l.b16 %v662
        %v792 = vunpack.c.h.b16 %v662
        %v793 = vunpack.c.l.b16 %v663
        %v794 = vunpack.c.h.b16 %v663
        %v795 = vunpack.c.l.b16 %v664
        %v796 = vunpack.c.h.b16 %v664
        %v797 = vunpack.c.l.b16 %v665
        %v798 = vunpack.c.h.b16 %v665
        %v799 = vunpack.c.l.b16 %v666
        %v800 = vunpack.c.h.b16 %v666
        %v801 = vunpack.c.l.b16 %v667
        %v802 = vunpack.c.h.b16 %v667
        %v803 = vunpack.c.l.b16 %v668
        %v804 = vunpack.c.h.b16 %v668
        %v805 = vunpack.c.l.b16 %v669
        %v806 = vunpack.c.h.b16 %v669
        %v807 = vunpack.c.l.b16 %v670
        %v808 = vunpack.c.h.b16 %v670
        %v809 = vunpack.c.l.b16 %v671
        %v810 = vunpack.c.h.b16 %v671
        %v811 = vunpack.c.l.b16 %v672
        %v812 = vunpack.c.h.b16 %v672
        %v813 = vunpack.c.l.b16 %v673
        %v814 = vunpack.c.h.b16 %v673
        %v815 = vunpack.c.l.b16 %v674
        %v816 = vunpack.c.h.b16 %v674
        %v817 = vunpack.c.l.b16 %v675
        %v818 = vunpack.c.h.b16 %v675
        %v819 = vunpack.c.l.b16 %v676
        %v820 = vunpack.c.h.b16 %v676
        %v821 = vpack.c.b16 %v731, %v725
        %v822 = vpack.c.b16 %v732, %v726
        %v823 = vpack.c.b16 %v733, %v727
        %v824 = vpack.c.b16 %v734, %v728
        %v825 = vpack.c.b16 %v735, %v729
        %v826 = vpack.c.b16 %v736, %v730
        %v827 = vpack.c.b16 %v743, %v737
        %v828 = vpack.c.b16 %v744, %v738
        %v829 = vpack.c.b16 %v745, %v739
        %v830 = vpack.c.b16 %v746, %v740
        %v831 = vpack.c.b16 %v747, %v741
        %v832 = vpack.c.b16 %v748, %v742
        %v833 = vpack.c.b16 %v755, %v749
        %v834 = vpack.c.b16 %v756, %v750
        %v835 = vpack.c.b16 %v757, %v751
        %v836 = vpack.c.b16 %v758, %v752
        %v837 = vpack.c.b16 %v759, %v753
        %v838 = vpack.c.b16 %v760, %v754
        %v839 = vpack.c.b16 %v767, %v761
        %v840 = vpack.c.b16 %v768, %v762
        %v841 = vpack.c.b16 %v769, %v763
        %v842 = vpack.c.b16 %v770, %v764
        %v843 = vpack.c.b16 %v771, %v765
        %v844 = vpack.c.b16 %v772, %v766
        %v845 = vpack.c.b16 %v779, %v773
        %v846 = vpack.c.b16 %v780, %v774
        %v847 = vpack.c.b16 %v781, %v775
        %v848 = vpack.c.b16 %v782, %v776
        %v849 = vpack.c.b16 %v783, %v777
        %v850 = vpack.c.b16 %v784, %v778
        %v851 = vpack.c.b16 %v791, %v785
        %v852 = vpack.c.b16 %v792, %v786
        %v853 = vpack.c.b16 %v793, %v787
        %v854 = vpack.c.b16 %v794, %v788
        %v855 = vpack.c.b16 %v795, %v789
        %v856 = vpack.c.b16 %v796, %v790
        %v857 = vpack.c.b16 %v803, %v797
        %v858 = vpack.c.b16 %v804, %v798
        %v859 = vpack.c.b16 %v805, %v799
        %v860 = vpack.c.b16 %v806, %v800
        %v861 = vpack.c.b16 %v807, %v801
        %v862 = vpack.c.b16 %v808, %v802
        %v863 = vpack.c.b16 %v815, %v809
        %v864 = vpack.c.b16 %v816, %v810
        %v865 = vpack.c.b16 %v817, %v811
        %v866 = vpack.c.b16 %v818, %v812
        %v867 = vpack.c.b16 %v819, %v813
        %v868 = vpack.c.b16 %v820, %v814
        %917 = vmatpush.bf16.msra.mxu0 %v863
        %918 = vmatpush.bf16.msra.mxu0 %v857
        %919 = vmatpush.bf16.msra.mxu0 %v851
        %920 = vmatpush.bf16.msra.mxu0 %v845
        %921 = vmatpush.bf16.msra.mxu0 %v839
        %922 = vmatpush.bf16.msra.mxu0 %v833
        %923 = vmatpush.bf16.msra.mxu0 %v827
        %924 = vmatpush.bf16.msra.mxu0 %v821
        %925 = vmatmul.bf16.gmra.mxu0 %v625
        %v926 = vpop.f32.mrf.mxu0
        %v927 = vadd.f32 0.0, %v926
        %v928 = vpop.f32.mrf.mxu0
        %v929 = vadd.f32 0.0, %v928
        %930 = vmatmul.bf16.gmra.mxu0 %v626
        %v931 = vpop.f32.mrf.mxu0
        %v932 = vadd.f32 0.0, %v931
        %v933 = vpop.f32.mrf.mxu0
        %v934 = vadd.f32 0.0, %v933
        %935 = vmatmul.bf16.gmra.mxu0 %v627
        %v936 = vpop.f32.mrf.mxu0
        %v937 = vadd.f32 0.0, %v936
        %v938 = vpop.f32.mrf.mxu0
        %v939 = vadd.f32 0.0, %v938
        %940 = vmatmul.bf16.gmra.mxu0 %v628
        %v941 = vpop.f32.mrf.mxu0
        %v942 = vadd.f32 0.0, %v941
        %v943 = vpop.f32.mrf.mxu0
        %v944 = vadd.f32 0.0, %v943
        %945 = vdwg.mxu0
        %946 = vmatpush.bf16.msra.mxu0 %v864
        %947 = vmatpush.bf16.msra.mxu0 %v858
        %948 = vmatpush.bf16.msra.mxu0 %v852
        %949 = vmatpush.bf16.msra.mxu0 %v846
        %950 = vmatpush.bf16.msra.mxu0 %v840
        %951 = vmatpush.bf16.msra.mxu0 %v834
        %952 = vmatpush.bf16.msra.mxu0 %v828
        %953 = vmatpush.bf16.msra.mxu0 %v822
        %954 = vmatmul.bf16.gmra.mxu0 %v625
        %v955 = vpop.f32.mrf.mxu0
        %v956 = vadd.f32 0.0, %v955
        %v957 = vpop.f32.mrf.mxu0
        %v958 = vadd.f32 0.0, %v957
        %959 = vmatmul.bf16.gmra.mxu0 %v626
        %v960 = vpop.f32.mrf.mxu0
        %v961 = vadd.f32 0.0, %v960
        %v962 = vpop.f32.mrf.mxu0
        %v963 = vadd.f32 0.0, %v962
        %964 = vmatmul.bf16.gmra.mxu0 %v627
        %v965 = vpop.f32.mrf.mxu0
        %v966 = vadd.f32 0.0, %v965
        %v967 = vpop.f32.mrf.mxu0
        %v968 = vadd.f32 0.0, %v967
        %969 = vmatmul.bf16.gmra.mxu0 %v628
        %v970 = vpop.f32.mrf.mxu0
        %v971 = vadd.f32 0.0, %v970
        %v972 = vpop.f32.mrf.mxu0
        %v973 = vadd.f32 0.0, %v972
        %974 = vdwg.mxu0
        %975 = vmatpush.bf16.msra.mxu0 %v865
        %976 = vmatpush.bf16.msra.mxu0 %v859
        %977 = vmatpush.bf16.msra.mxu0 %v853
        %978 = vmatpush.bf16.msra.mxu0 %v847
        %979 = vmatpush.bf16.msra.mxu0 %v841
        %980 = vmatpush.bf16.msra.mxu0 %v835
        %981 = vmatpush.bf16.msra.mxu0 %v829
        %982 = vmatpush.bf16.msra.mxu0 %v823
        %983 = vmatmul.bf16.gmra.mxu0 %v625
        %v984 = vpop.f32.mrf.mxu0
        %v985 = vadd.f32 0.0, %v984
        %v986 = vpop.f32.mrf.mxu0
        %v987 = vadd.f32 0.0, %v986
        %988 = vmatmul.bf16.gmra.mxu0 %v626
        %v989 = vpop.f32.mrf.mxu0
        %v990 = vadd.f32 0.0, %v989
        %v991 = vpop.f32.mrf.mxu0
        %v992 = vadd.f32 0.0, %v991
        %993 = vmatmul.bf16.gmra.mxu0 %v627
        %v994 = vpop.f32.mrf.mxu0
        %v995 = vadd.f32 0.0, %v994
        %v996 = vpop.f32.mrf.mxu0
        %v997 = vadd.f32 0.0, %v996
        %998 = vmatmul.bf16.gmra.mxu0 %v628
        %v999 = vpop.f32.mrf.mxu0
        %v1000 = vadd.f32 0.0, %v999
        %v1001 = vpop.f32.mrf.mxu0
        %v1002 = vadd.f32 0.0, %v1001
        %1003 = vdwg.mxu0
        %1004 = vmatpush.bf16.msra.mxu0 %v866
        %1005 = vmatpush.bf16.msra.mxu0 %v860
        %1006 = vmatpush.bf16.msra.mxu0 %v854
        %1007 = vmatpush.bf16.msra.mxu0 %v848
        %1008 = vmatpush.bf16.msra.mxu0 %v842
        %1009 = vmatpush.bf16.msra.mxu0 %v836
        %1010 = vmatpush.bf16.msra.mxu0 %v830
        %1011 = vmatpush.bf16.msra.mxu0 %v824
        %1012 = vmatmul.bf16.gmra.mxu0 %v625
        %v1013 = vpop.f32.mrf.mxu0
        %v1014 = vadd.f32 0.0, %v1013
        %v1015 = vpop.f32.mrf.mxu0
        %v1016 = vadd.f32 0.0, %v1015
        %1017 = vmatmul.bf16.gmra.mxu0 %v626
        %v1018 = vpop.f32.mrf.mxu0
        %v1019 = vadd.f32 0.0, %v1018
        %v1020 = vpop.f32.mrf.mxu0
        %v1021 = vadd.f32 0.0, %v1020
        %1022 = vmatmul.bf16.gmra.mxu0 %v627
        %v1023 = vpop.f32.mrf.mxu0
        %v1024 = vadd.f32 0.0, %v1023
        %v1025 = vpop.f32.mrf.mxu0
        %v1026 = vadd.f32 0.0, %v1025
        %1027 = vmatmul.bf16.gmra.mxu0 %v628
        %v1028 = vpop.f32.mrf.mxu0
        %v1029 = vadd.f32 0.0, %v1028
        %v1030 = vpop.f32.mrf.mxu0
        %v1031 = vadd.f32 0.0, %v1030
        %1032 = vdwg.mxu0
        %1033 = vmatpush.bf16.msra.mxu0 %v867
        %1034 = vmatpush.bf16.msra.mxu0 %v861
        %1035 = vmatpush.bf16.msra.mxu0 %v855
        %1036 = vmatpush.bf16.msra.mxu0 %v849
        %1037 = vmatpush.bf16.msra.mxu0 %v843
        %1038 = vmatpush.bf16.msra.mxu0 %v837
        %1039 = vmatpush.bf16.msra.mxu0 %v831
        %1040 = vmatpush.bf16.msra.mxu0 %v825
        %1041 = vmatmul.bf16.gmra.mxu0 %v625
        %v1042 = vpop.f32.mrf.mxu0
        %v1043 = vadd.f32 0.0, %v1042
        %v1044 = vpop.f32.mrf.mxu0
        %v1045 = vadd.f32 0.0, %v1044
        %1046 = vmatmul.bf16.gmra.mxu0 %v626
        %v1047 = vpop.f32.mrf.mxu0
        %v1048 = vadd.f32 0.0, %v1047
        %v1049 = vpop.f32.mrf.mxu0
        %v1050 = vadd.f32 0.0, %v1049
        %1051 = vmatmul.bf16.gmra.mxu0 %v627
        %v1052 = vpop.f32.mrf.mxu0
        %v1053 = vadd.f32 0.0, %v1052
        %v1054 = vpop.f32.mrf.mxu0
        %v1055 = vadd.f32 0.0, %v1054
        %1056 = vmatmul.bf16.gmra.mxu0 %v628
        %v1057 = vpop.f32.mrf.mxu0
        %v1058 = vadd.f32 0.0, %v1057
        %v1059 = vpop.f32.mrf.mxu0
        %v1060 = vadd.f32 0.0, %v1059
        %1061 = vdwg.mxu0
        %1062 = vmatpush.bf16.msra.mxu0 %v868
        %1063 = vmatpush.bf16.msra.mxu0 %v862
        %1064 = vmatpush.bf16.msra.mxu0 %v856
        %1065 = vmatpush.bf16.msra.mxu0 %v850
        %1066 = vmatpush.bf16.msra.mxu0 %v844
        %1067 = vmatpush.bf16.msra.mxu0 %v838
        %1068 = vmatpush.bf16.msra.mxu0 %v832
        %1069 = vmatpush.bf16.msra.mxu0 %v826
        %1070 = vmatmul.bf16.gmra.mxu0 %v625
        %v1071 = vpop.f32.mrf.mxu0
        %v1072 = vadd.f32 0.0, %v1071
        %v1073 = vpop.f32.mrf.mxu0
        %v1074 = vadd.f32 0.0, %v1073
        %1075 = vmatmul.bf16.gmra.mxu0 %v626
        %v1076 = vpop.f32.mrf.mxu0
        %v1077 = vadd.f32 0.0, %v1076
        %v1078 = vpop.f32.mrf.mxu0
        %v1079 = vadd.f32 0.0, %v1078
        %1080 = vmatmul.bf16.gmra.mxu0 %v627
        %v1081 = vpop.f32.mrf.mxu0
        %v1082 = vadd.f32 0.0, %v1081
        %v1083 = vpop.f32.mrf.mxu0
        %v1084 = vadd.f32 0.0, %v1083
        %1085 = vmatmul.bf16.gmra.mxu0 %v628
        %v1086 = vpop.f32.mrf.mxu0
        %v1087 = vadd.f32 0.0, %v1086
        %v1088 = vpop.f32.mrf.mxu0
        %v1089 = vadd.f32 0.0, %v1088
        %1090 = vdwg.mxu0
        %v1091 = vlaneseq
        %v1092 = vshrl.u32 %v1091, 7
        %v1093 = vadd.s32 %v1092, 8
        %v1094 = vadd.s32 %v1092, 16
        %v1095 = vadd.s32 %v1092, 24
        %v1096 = vadd.s32 %v1092, 32
        %v1097 = vadd.s32 %v1092, 40
        %v1098 = vadd.s32 %v1092, 48
        %v1099 = vadd.s32 %v1092, 56
        %vm1100 = vcmp.lt.s32.totalorder %v1092, 0
        %v1101 = vsub.s32 0, %v1092
        %v1102 = vsel %vm1100, %v1101, %v1092
        %v1103 = vshrl.u32 %v1102, 4
        %v1104 = vand.u32 %v1102, 15
        %v1105 = vsub.s32 0, %v1104
        %v1106 = vsel %vm1100, %v1105, %v1104
        %vm1107 = vcmp.lt.s32.totalorder %v1093, 0
        %v1108 = vsub.s32 0, %v1093
        %v1109 = vsel %vm1107, %v1108, %v1093
        %v1110 = vshrl.u32 %v1109, 4
        %v1111 = vand.u32 %v1109, 15
        %v1112 = vsub.s32 0, %v1111
        %v1113 = vsel %vm1107, %v1112, %v1111
        %vm1114 = vcmp.lt.s32.totalorder %v1094, 0
        %v1115 = vsub.s32 0, %v1094
        %v1116 = vsel %vm1114, %v1115, %v1094
        %v1117 = vshrl.u32 %v1116, 4
        %v1118 = vand.u32 %v1116, 15
        %v1119 = vsub.s32 0, %v1118
        %v1120 = vsel %vm1114, %v1119, %v1118
        %vm1121 = vcmp.lt.s32.totalorder %v1095, 0
        %v1122 = vsub.s32 0, %v1095
        %v1123 = vsel %vm1121, %v1122, %v1095
        %v1124 = vshrl.u32 %v1123, 4
        %v1125 = vand.u32 %v1123, 15
        %v1126 = vsub.s32 0, %v1125
        %v1127 = vsel %vm1121, %v1126, %v1125
        %vm1128 = vcmp.lt.s32.totalorder %v1096, 0
        %v1129 = vsub.s32 0, %v1096
        %v1130 = vsel %vm1128, %v1129, %v1096
        %v1131 = vshrl.u32 %v1130, 4
        %v1132 = vand.u32 %v1130, 15
        %v1133 = vsub.s32 0, %v1132
        %v1134 = vsel %vm1128, %v1133, %v1132
        %vm1135 = vcmp.lt.s32.totalorder %v1097, 0
        %v1136 = vsub.s32 0, %v1097
        %v1137 = vsel %vm1135, %v1136, %v1097
        %v1138 = vshrl.u32 %v1137, 4
        %v1139 = vand.u32 %v1137, 15
        %v1140 = vsub.s32 0, %v1139
        %v1141 = vsel %vm1135, %v1140, %v1139
        %vm1142 = vcmp.lt.s32.totalorder %v1098, 0
        %v1143 = vsub.s32 0, %v1098
        %v1144 = vsel %vm1142, %v1143, %v1098
        %v1145 = vshrl.u32 %v1144, 4
        %v1146 = vand.u32 %v1144, 15
        %v1147 = vsub.s32 0, %v1146
        %v1148 = vsel %vm1142, %v1147, %v1146
        %vm1149 = vcmp.lt.s32.totalorder %v1099, 0
        %v1150 = vsub.s32 0, %v1099
        %v1151 = vsel %vm1149, %v1150, %v1099
        %v1152 = vshrl.u32 %v1151, 4
        %v1153 = vand.u32 %v1151, 15
        %v1154 = vsub.s32 0, %v1153
        %v1155 = vsel %vm1149, %v1154, %v1153
        %vm1156 = vcmp.ne.s32.totalorder %v1106, 0
        %vm1157 = vcmp.ne.s32.totalorder %v1113, 0
        %vm1158 = vcmp.ne.s32.totalorder %v1120, 0
        %vm1159 = vcmp.ne.s32.totalorder %v1127, 0
        %vm1160 = vcmp.ne.s32.totalorder %v1134, 0
        %vm1161 = vcmp.ne.s32.totalorder %v1141, 0
        %vm1162 = vcmp.ne.s32.totalorder %v1148, 0
        %vm1163 = vcmp.ne.s32.totalorder %v1155, 0
        %vm1164 = vcmp.lt.s32.totalorder %v1106, 0
        %vm1165 = vcmp.lt.s32.totalorder %v1113, 0
        %vm1166 = vcmp.lt.s32.totalorder %v1120, 0
        %vm1167 = vcmp.lt.s32.totalorder %v1127, 0
        %vm1168 = vcmp.lt.s32.totalorder %v1134, 0
        %vm1169 = vcmp.lt.s32.totalorder %v1141, 0
        %vm1170 = vcmp.lt.s32.totalorder %v1148, 0
        %vm1171 = vcmp.lt.s32.totalorder %v1155, 0
        %vm1172 = vmand %vm1164, %vm1156
        %vm1173 = vmand %vm1165, %vm1157
        %vm1174 = vmand %vm1166, %vm1158
        %vm1175 = vmand %vm1167, %vm1159
        %vm1176 = vmand %vm1168, %vm1160
        %vm1177 = vmand %vm1169, %vm1161
        %vm1178 = vmand %vm1170, %vm1162
        %vm1179 = vmand %vm1171, %vm1163
        %v1180 = vadd.s32 %v1106, 16
        %v1181 = vadd.s32 %v1113, 16
        %v1182 = vadd.s32 %v1120, 16
        %v1183 = vadd.s32 %v1127, 16
        %v1184 = vadd.s32 %v1134, 16
        %v1185 = vadd.s32 %v1141, 16
        %v1186 = vadd.s32 %v1148, 16
        %v1187 = vadd.s32 %v1155, 16
        %v1188 = vsel %vm1172, %v1180, %v1106
        %v1189 = vsel %vm1173, %v1181, %v1113
        %v1190 = vsel %vm1174, %v1182, %v1120
        %v1191 = vsel %vm1175, %v1183, %v1127
        %v1192 = vsel %vm1176, %v1184, %v1134
        %v1193 = vsel %vm1177, %v1185, %v1141
        %v1194 = vsel %vm1178, %v1186, %v1148
        %v1195 = vsel %vm1179, %v1187, %v1155
        %vm1196 = vcmp.ge.s32.totalorder %v1188, 1
        %vm1197 = vcmp.ge.s32.totalorder %v1189, 1
        %vm1198 = vcmp.ge.s32.totalorder %v1190, 1
        %vm1199 = vcmp.ge.s32.totalorder %v1191, 1
        %vm1200 = vcmp.ge.s32.totalorder %v1192, 1
        %vm1201 = vcmp.ge.s32.totalorder %v1193, 1
        %vm1202 = vcmp.ge.s32.totalorder %v1194, 1
        %vm1203 = vcmp.ge.s32.totalorder %v1195, 1
        %v1204 = vrot.slane %v927, 7
        %v1205 = vrot.slane %v929, 7
        %v1206 = vrot.slane %v932, 7
        %v1207 = vrot.slane %v934, 7
        %v1208 = vrot.slane %v937, 7
        %v1209 = vrot.slane %v939, 7
        %v1210 = vrot.slane %v942, 7
        %v1211 = vrot.slane %v944, 7
        %vm1212 = vcmp.lt.s32.totalorder %v1092, 1
        %v1213 = vsel %vm1212, %v1210, %v1211
        %v1214 = vsel %vm1212, %v1209, %v1210
        %v1215 = vsel %vm1212, %v1208, %v1209
        %v1216 = vsel %vm1212, %v1207, %v1208
        %v1217 = vsel %vm1212, %v1206, %v1207
        %v1218 = vsel %vm1212, %v1205, %v1206
        %v1219 = vsel %vm1212, %v1204, %v1205
        %v1220 = vsel %vm1212, %v1211, %v1204
        %v1221 = vsel %vm1196, 1, 0
        %v1222 = vsel %vm1197, 1, 0
        %v1223 = vsel %vm1198, 1, 0
        %v1224 = vsel %vm1199, 1, 0
        %v1225 = vsel %vm1200, 1, 0
        %v1226 = vsel %vm1201, 1, 0
        %v1227 = vsel %vm1202, 1, 0
        %v1228 = vsel %vm1203, 1, 0
        %vm1229 = vcmp.eq.s32.totalorder %v1221, 1
        %vm1230 = vcmp.eq.s32.totalorder %v1222, 1
        %vm1231 = vcmp.eq.s32.totalorder %v1223, 1
        %vm1232 = vcmp.eq.s32.totalorder %v1224, 1
        %vm1233 = vcmp.eq.s32.totalorder %v1225, 1
        %vm1234 = vcmp.eq.s32.totalorder %v1226, 1
        %vm1235 = vcmp.eq.s32.totalorder %v1227, 1
        %vm1236 = vcmp.eq.s32.totalorder %v1228, 1
        %v1237 = vsel %vm1229, %v1220, 0.0
        %v1238 = vsel %vm1230, %v1219, 0.0
        %v1239 = vsel %vm1231, %v1218, 0.0
        %v1240 = vsel %vm1232, %v1217, 0.0
        %v1241 = vsel %vm1233, %v1216, 0.0
        %v1242 = vsel %vm1234, %v1215, 0.0
        %v1243 = vsel %vm1235, %v1214, 0.0
        %v1244 = vsel %vm1236, %v1213, 0.0
        %v1245 = vadd.f32 %v1237, %v956
        %v1246 = vadd.f32 %v1238, %v958
        %v1247 = vadd.f32 %v1239, %v961
        %v1248 = vadd.f32 %v1240, %v963
        %v1249 = vadd.f32 %v1241, %v966
        %v1250 = vadd.f32 %v1242, %v968
        %v1251 = vadd.f32 %v1243, %v971
        %v1252 = vadd.f32 %v1244, %v973
        %vm1253 = vcmp.lt.s32.totalorder %v1188, 15
        %vm1254 = vcmp.lt.s32.totalorder %v1189, 15
        %vm1255 = vcmp.lt.s32.totalorder %v1190, 15
        %vm1256 = vcmp.lt.s32.totalorder %v1191, 15
        %vm1257 = vcmp.lt.s32.totalorder %v1192, 15
        %vm1258 = vcmp.lt.s32.totalorder %v1193, 15
        %vm1259 = vcmp.lt.s32.totalorder %v1194, 15
        %vm1260 = vcmp.lt.s32.totalorder %v1195, 15
        %v1261 = vrot.slane %v985, 1
        %v1262 = vrot.slane %v987, 1
        %v1263 = vrot.slane %v990, 1
        %v1264 = vrot.slane %v992, 1
        %v1265 = vrot.slane %v995, 1
        %v1266 = vrot.slane %v997, 1
        %v1267 = vrot.slane %v1000, 1
        %v1268 = vrot.slane %v1002, 1
        %vm1269 = vcmp.lt.s32.totalorder %v1092, 7
        %v1270 = vsel %vm1269, %v1267, %v1268
        %v1271 = vsel %vm1269, %v1266, %v1267
        %v1272 = vsel %vm1269, %v1265, %v1266
        %v1273 = vsel %vm1269, %v1264, %v1265
        %v1274 = vsel %vm1269, %v1263, %v1264
        %v1275 = vsel %vm1269, %v1262, %v1263
        %v1276 = vsel %vm1269, %v1261, %v1262
        %v1277 = vsel %vm1269, %v1268, %v1261
        %v1278 = vsel %vm1253, 1, 0
        %v1279 = vsel %vm1254, 1, 0
        %v1280 = vsel %vm1255, 1, 0
        %v1281 = vsel %vm1256, 1, 0
        %v1282 = vsel %vm1257, 1, 0
        %v1283 = vsel %vm1258, 1, 0
        %v1284 = vsel %vm1259, 1, 0
        %v1285 = vsel %vm1260, 1, 0
        %vm1286 = vcmp.eq.s32.totalorder %v1278, 1
        %vm1287 = vcmp.eq.s32.totalorder %v1279, 1
        %vm1288 = vcmp.eq.s32.totalorder %v1280, 1
        %vm1289 = vcmp.eq.s32.totalorder %v1281, 1
        %vm1290 = vcmp.eq.s32.totalorder %v1282, 1
        %vm1291 = vcmp.eq.s32.totalorder %v1283, 1
        %vm1292 = vcmp.eq.s32.totalorder %v1284, 1
        %vm1293 = vcmp.eq.s32.totalorder %v1285, 1
        %v1294 = vsel %vm1286, %v1276, 0.0
        %v1295 = vsel %vm1287, %v1275, 0.0
        %v1296 = vsel %vm1288, %v1274, 0.0
        %v1297 = vsel %vm1289, %v1273, 0.0
        %v1298 = vsel %vm1290, %v1272, 0.0
        %v1299 = vsel %vm1291, %v1271, 0.0
        %v1300 = vsel %vm1292, %v1270, 0.0
        %v1301 = vsel %vm1293, %v1277, 0.0
        %v1302 = vadd.f32 %v1245, %v1294
        %v1303 = vadd.f32 %v1246, %v1295
        %v1304 = vadd.f32 %v1247, %v1296
        %v1305 = vadd.f32 %v1248, %v1297
        %v1306 = vadd.f32 %v1249, %v1298
        %v1307 = vadd.f32 %v1250, %v1299
        %v1308 = vadd.f32 %v1251, %v1300
        %v1309 = vadd.f32 %v1252, %v1301
        %v1310 = vld [vmem:[#allocation13 + $0x2] sm:$0x1]
        %v1311 = vperm.slane %v1310, 0
        %v1312 = vadd.f32 %v1302, %v1311
        %v1313 = vadd.f32 %v1303, %v1311
        %v1314 = vadd.f32 %v1304, %v1311
        %v1315 = vadd.f32 %v1305, %v1311
        %v1316 = vadd.f32 %v1306, %v1311
        %v1317 = vadd.f32 %v1307, %v1311
        %v1318 = vadd.f32 %v1308, %v1311
        %v1319 = vadd.f32 %v1309, %v1311
        %v1320 = vadd.f32 %v1312, 3.0
        %v1321 = vadd.f32 %v1313, 3.0
        %v1322 = vadd.f32 %v1314, 3.0
        %v1323 = vadd.f32 %v1315, 3.0
        %v1324 = vadd.f32 %v1316, 3.0
        %v1325 = vadd.f32 %v1317, 3.0
        %v1326 = vadd.f32 %v1318, 3.0
        %v1327 = vadd.f32 %v1319, 3.0
        %v1328 = vmax.f32 %v1320, 0.0
        %v1329 = vmax.f32 %v1321, 0.0
        %v1330 = vmax.f32 %v1322, 0.0
        %v1331 = vmax.f32 %v1323, 0.0
        %v1332 = vmax.f32 %v1324, 0.0
        %v1333 = vmax.f32 %v1325, 0.0
        %v1334 = vmax.f32 %v1326, 0.0
        %v1335 = vmax.f32 %v1327, 0.0
        %v1336 = vmin.f32 %v1328, 6.0
        %v1337 = vmin.f32 %v1329, 6.0
        %v1338 = vmin.f32 %v1330, 6.0
        %v1339 = vmin.f32 %v1331, 6.0
        %v1340 = vmin.f32 %v1332, 6.0
        %v1341 = vmin.f32 %v1333, 6.0
        %v1342 = vmin.f32 %v1334, 6.0
        %v1343 = vmin.f32 %v1335, 6.0
        %v1344 = vmul.f32 %v1312, %v1336
        %v1345 = vmul.f32 %v1313, %v1337
        %v1346 = vmul.f32 %v1314, %v1338
        %v1347 = vmul.f32 %v1315, %v1339
        %v1348 = vmul.f32 %v1316, %v1340
        %v1349 = vmul.f32 %v1317, %v1341
        %v1350 = vmul.f32 %v1318, %v1342
        %v1351 = vmul.f32 %v1319, %v1343
        %v1352 = vmul.f32 %v1344, 0.16666667
        %v1353 = vmul.f32 %v1345, 0.16666667
        %v1354 = vmul.f32 %v1346, 0.16666667
        %v1355 = vmul.f32 %v1347, 0.16666667
        %v1356 = vmul.f32 %v1348, 0.16666667
        %v1357 = vmul.f32 %v1349, 0.16666667
        %v1358 = vmul.f32 %v1350, 0.16666667
        %v1359 = vmul.f32 %v1351, 0.16666667
        %vm1360 = vcmp.ge.s32.totalorder %v1188, 2
        %vm1361 = vcmp.ge.s32.totalorder %v1189, 2
        %vm1362 = vcmp.ge.s32.totalorder %v1190, 2
        %vm1363 = vcmp.ge.s32.totalorder %v1191, 2
        %vm1364 = vcmp.ge.s32.totalorder %v1192, 2
        %vm1365 = vcmp.ge.s32.totalorder %v1193, 2
        %vm1366 = vcmp.ge.s32.totalorder %v1194, 2
        %vm1367 = vcmp.ge.s32.totalorder %v1195, 2
        %v1368 = vrot.slane %v1014, 6
        %v1369 = vrot.slane %v1016, 6
        %v1370 = vrot.slane %v1019, 6
        %v1371 = vrot.slane %v1021, 6
        %v1372 = vrot.slane %v1024, 6
        %v1373 = vrot.slane %v1026, 6
        %v1374 = vrot.slane %v1029, 6
        %v1375 = vrot.slane %v1031, 6
        %vm1376 = vcmp.lt.s32.totalorder %v1092, 2
        %v1377 = vsel %vm1376, %v1374, %v1375
        %v1378 = vsel %vm1376, %v1373, %v1374
        %v1379 = vsel %vm1376, %v1372, %v1373
        %v1380 = vsel %vm1376, %v1371, %v1372
        %v1381 = vsel %vm1376, %v1370, %v1371
        %v1382 = vsel %vm1376, %v1369, %v1370
        %v1383 = vsel %vm1376, %v1368, %v1369
        %v1384 = vsel %vm1376, %v1375, %v1368
        %v1385 = vsel %vm1360, 1, 0
        %v1386 = vsel %vm1361, 1, 0
        %v1387 = vsel %vm1362, 1, 0
        %v1388 = vsel %vm1363, 1, 0
        %v1389 = vsel %vm1364, 1, 0
        %v1390 = vsel %vm1365, 1, 0
        %v1391 = vsel %vm1366, 1, 0
        %v1392 = vsel %vm1367, 1, 0
        %vm1393 = vcmp.eq.s32.totalorder %v1385, 1
        %vm1394 = vcmp.eq.s32.totalorder %v1386, 1
        %vm1395 = vcmp.eq.s32.totalorder %v1387, 1
        %vm1396 = vcmp.eq.s32.totalorder %v1388, 1
        %vm1397 = vcmp.eq.s32.totalorder %v1389, 1
        %vm1398 = vcmp.eq.s32.totalorder %v1390, 1
        %vm1399 = vcmp.eq.s32.totalorder %v1391, 1
        %vm1400 = vcmp.eq.s32.totalorder %v1392, 1
        %v1401 = vsel %vm1393, %v1384, 0.0
        %v1402 = vsel %vm1394, %v1383, 0.0
        %v1403 = vsel %vm1395, %v1382, 0.0
        %v1404 = vsel %vm1396, %v1381, 0.0
        %v1405 = vsel %vm1397, %v1380, 0.0
        %v1406 = vsel %vm1398, %v1379, 0.0
        %v1407 = vsel %vm1399, %v1378, 0.0
        %v1408 = vsel %vm1400, %v1377, 0.0
        %v1409 = vadd.f32 %v1401, %v1043
        %v1410 = vadd.f32 %v1402, %v1045
        %v1411 = vadd.f32 %v1403, %v1048
        %v1412 = vadd.f32 %v1404, %v1050
        %v1413 = vadd.f32 %v1405, %v1053
        %v1414 = vadd.f32 %v1406, %v1055
        %v1415 = vadd.f32 %v1407, %v1058
        %v1416 = vadd.f32 %v1408, %v1060
        %vm1417 = vcmp.lt.s32.totalorder %v1188, 14
        %vm1418 = vcmp.lt.s32.totalorder %v1189, 14
        %vm1419 = vcmp.lt.s32.totalorder %v1190, 14
        %vm1420 = vcmp.lt.s32.totalorder %v1191, 14
        %vm1421 = vcmp.lt.s32.totalorder %v1192, 14
        %vm1422 = vcmp.lt.s32.totalorder %v1193, 14
        %vm1423 = vcmp.lt.s32.totalorder %v1194, 14
        %vm1424 = vcmp.lt.s32.totalorder %v1195, 14
        %v1425 = vrot.slane %v1072, 2
        %v1426 = vrot.slane %v1074, 2
        %v1427 = vrot.slane %v1077, 2
        %v1428 = vrot.slane %v1079, 2
        %v1429 = vrot.slane %v1082, 2
        %v1430 = vrot.slane %v1084, 2
        %v1431 = vrot.slane %v1087, 2
        %v1432 = vrot.slane %v1089, 2
        %vm1433 = vcmp.lt.s32.totalorder %v1092, 6
        %v1434 = vsel %vm1433, %v1431, %v1432
        %v1435 = vsel %vm1433, %v1430, %v1431
        %v1436 = vsel %vm1433, %v1429, %v1430
        %v1437 = vsel %vm1433, %v1428, %v1429
        %v1438 = vsel %vm1433, %v1427, %v1428
        %v1439 = vsel %vm1433, %v1426, %v1427
        %v1440 = vsel %vm1433, %v1425, %v1426
        %v1441 = vsel %vm1433, %v1432, %v1425
        %v1442 = vsel %vm1417, 1, 0
        %v1443 = vsel %vm1418, 1, 0
        %v1444 = vsel %vm1419, 1, 0
        %v1445 = vsel %vm1420, 1, 0
        %v1446 = vsel %vm1421, 1, 0
        %v1447 = vsel %vm1422, 1, 0
        %v1448 = vsel %vm1423, 1, 0
        %v1449 = vsel %vm1424, 1, 0
        %vm1450 = vcmp.eq.s32.totalorder %v1442, 1
        %vm1451 = vcmp.eq.s32.totalorder %v1443, 1
        %vm1452 = vcmp.eq.s32.totalorder %v1444, 1
        %vm1453 = vcmp.eq.s32.totalorder %v1445, 1
        %vm1454 = vcmp.eq.s32.totalorder %v1446, 1
        %vm1455 = vcmp.eq.s32.totalorder %v1447, 1
        %vm1456 = vcmp.eq.s32.totalorder %v1448, 1
        %vm1457 = vcmp.eq.s32.totalorder %v1449, 1
        %v1458 = vsel %vm1450, %v1440, 0.0
        %v1459 = vsel %vm1451, %v1439, 0.0
        %v1460 = vsel %vm1452, %v1438, 0.0
        %v1461 = vsel %vm1453, %v1437, 0.0
        %v1462 = vsel %vm1454, %v1436, 0.0
        %v1463 = vsel %vm1455, %v1435, 0.0
        %v1464 = vsel %vm1456, %v1434, 0.0
        %v1465 = vsel %vm1457, %v1441, 0.0
        %v1466 = vadd.f32 %v1409, %v1458
        %v1467 = vadd.f32 %v1410, %v1459
        %v1468 = vadd.f32 %v1411, %v1460
        %v1469 = vadd.f32 %v1412, %v1461
        %v1470 = vadd.f32 %v1413, %v1462
        %v1471 = vadd.f32 %v1414, %v1463
        %v1472 = vadd.f32 %v1415, %v1464
        %v1473 = vadd.f32 %v1416, %v1465
        %v1474 = vld [vmem:[#allocation13 + $0x3] sm:$0x1]
        %v1475 = vperm.slane %v1474, 0
        %v1476 = vadd.f32 %v1466, %v1475
        %v1477 = vadd.f32 %v1467, %v1475
        %v1478 = vadd.f32 %v1468, %v1475
        %v1479 = vadd.f32 %v1469, %v1475
        %v1480 = vadd.f32 %v1470, %v1475
        %v1481 = vadd.f32 %v1471, %v1475
        %v1482 = vadd.f32 %v1472, %v1475
        %v1483 = vadd.f32 %v1473, %v1475
        %v1484 = vadd.f32 %v1476, 3.0
        %v1485 = vadd.f32 %v1477, 3.0
        %v1486 = vadd.f32 %v1478, 3.0
        %v1487 = vadd.f32 %v1479, 3.0
        %v1488 = vadd.f32 %v1480, 3.0
        %v1489 = vadd.f32 %v1481, 3.0
        %v1490 = vadd.f32 %v1482, 3.0
        %v1491 = vadd.f32 %v1483, 3.0
        %v1492 = vmax.f32 %v1484, 0.0
        %v1493 = vmax.f32 %v1485, 0.0
        %v1494 = vmax.f32 %v1486, 0.0
        %v1495 = vmax.f32 %v1487, 0.0
        %v1496 = vmax.f32 %v1488, 0.0
        %v1497 = vmax.f32 %v1489, 0.0
        %v1498 = vmax.f32 %v1490, 0.0
        %v1499 = vmax.f32 %v1491, 0.0
        %v1500 = vmin.f32 %v1492, 6.0
        %v1501 = vmin.f32 %v1493, 6.0
        %v1502 = vmin.f32 %v1494, 6.0
        %v1503 = vmin.f32 %v1495, 6.0
        %v1504 = vmin.f32 %v1496, 6.0
        %v1505 = vmin.f32 %v1497, 6.0
        %v1506 = vmin.f32 %v1498, 6.0
        %v1507 = vmin.f32 %v1499, 6.0
        %v1508 = vmul.f32 %v1476, %v1500
        %v1509 = vmul.f32 %v1477, %v1501
        %v1510 = vmul.f32 %v1478, %v1502
        %v1511 = vmul.f32 %v1479, %v1503
        %v1512 = vmul.f32 %v1480, %v1504
        %v1513 = vmul.f32 %v1481, %v1505
        %v1514 = vmul.f32 %v1482, %v1506
        %v1515 = vmul.f32 %v1483, %v1507
        %v1516 = vmul.f32 %v1508, 0.16666667
        %v1517 = vmul.f32 %v1509, 0.16666667
        %v1518 = vmul.f32 %v1510, 0.16666667
        %v1519 = vmul.f32 %v1511, 0.16666667
        %v1520 = vmul.f32 %v1512, 0.16666667
        %v1521 = vmul.f32 %v1513, 0.16666667
        %v1522 = vmul.f32 %v1514, 0.16666667
        %v1523 = vmul.f32 %v1515, 0.16666667
        %v1524 = vadd.f32 %v1352, %v1516
        %v1525 = vadd.f32 %v1353, %v1517
        %v1526 = vadd.f32 %v1354, %v1518
        %v1527 = vadd.f32 %v1355, %v1519
        %v1528 = vadd.f32 %v1356, %v1520
        %v1529 = vadd.f32 %v1357, %v1521
        %v1530 = vadd.f32 %v1358, %v1522
        %v1531 = vadd.f32 %v1359, %v1523
        %v1532 = vadd.f32 %v1524, %v1525
        %v1533 = vrot.slane %v1532, 4
        %v1534 = vadd.f32 %v1532, %v1533
        %v1535 = vrot.slane %v1534, 2
        %v1536 = vadd.f32 %v1534, %v1535
        %v1537 = vrot.slane %v1536, 1
        %v1538 = vadd.f32 %v1536, %v1537
        %v1539 = vadd.f32 %v1526, %v1527
        %v1540 = vrot.slane %v1539, 4
        %v1541 = vadd.f32 %v1539, %v1540
        %v1542 = vrot.slane %v1541, 2
        %v1543 = vadd.f32 %v1541, %v1542
        %v1544 = vrot.slane %v1543, 1
        %v1545 = vadd.f32 %v1543, %v1544
        %v1546 = vadd.f32 %v1528, %v1529
        %v1547 = vrot.slane %v1546, 4
        %v1548 = vadd.f32 %v1546, %v1547
        %v1549 = vrot.slane %v1548, 2
        %v1550 = vadd.f32 %v1548, %v1549
        %v1551 = vrot.slane %v1550, 1
        %v1552 = vadd.f32 %v1550, %v1551
        %v1553 = vadd.f32 %v1530, %v1531
        %v1554 = vrot.slane %v1553, 4
        %v1555 = vadd.f32 %v1553, %v1554
        %v1556 = vrot.slane %v1555, 2
        %v1557 = vadd.f32 %v1555, %v1556
        %v1558 = vrot.slane %v1557, 1
        %v1559 = vadd.f32 %v1557, %v1558
        %v1560 = vrcp.pop 16.0
        %v1561 = vmul.f32 16.0, %v1560
        %v1562 = vsub.f32 1.0, %v1561
        %v1563 = vmul.f32 %v1560, %v1562
        %v1564 = vadd.f32 %v1560, %v1563
        %vm1565 = vweird.f32 %v1560
        %v1566 = vsel %vm1565, %v1560, %v1564
        %v1567 = vmul.f32 %v1538, %v1566
        %v1568 = vmul.f32 %v1545, %v1566
        %v1569 = vmul.f32 %v1552, %v1566
        %v1570 = vmul.f32 %v1559, %v1566
        %v1571 = vpack.c.bf16 %v1567, %v1567
        %v1572 = vpack.c.bf16 %v1568, %v1568
        %v1573 = vpack.c.bf16 %v1569, %v1569
        %v1574 = vpack.c.bf16 %v1570, %v1570
        %v1575 = vld [vmem:[#allocation8] sm:$0xf]
        %v1576 = vld [vmem:[#allocation8 + $0x4] sm:$0xf]
        %v1577 = vld [vmem:[#allocation8 + $0x8] sm:$0xf]
        %v1578 = vld [vmem:[#allocation8 + $0xc] sm:$0xf]
        %v1579 = vld [vmem:[#allocation8 + $0x10] sm:$0xf]
        %v1580 = vld [vmem:[#allocation8 + $0x14] sm:$0xf]
        %v1581 = vld [vmem:[#allocation8 + $0x18] sm:$0xf]
        %v1582 = vld [vmem:[#allocation8 + $0x1c] sm:$0xf]
        %v1583 = vld [vmem:[#allocation8 + $0x20] sm:$0xf]
        %v1584 = vld [vmem:[#allocation8 + $0x24] sm:$0xf]
        %v1585 = vld [vmem:[#allocation8 + $0x28] sm:$0xf]
        %v1586 = vld [vmem:[#allocation8 + $0x2c] sm:$0xf]
        %v1587 = vld [vmem:[#allocation8 + $0x30] sm:$0xf]
        %v1588 = vld [vmem:[#allocation8 + $0x34] sm:$0xf]
        %v1589 = vld [vmem:[#allocation8 + $0x38] sm:$0xf]
        %v1590 = vld [vmem:[#allocation8 + $0x3c] sm:$0xf]
        %v1591 = vld [vmem:[#allocation13 + $0x4] sm:$0x1]
        %v1592 = vperm.slane %v1591, 0
        %v1597 = vunpack.c.l.b16 %v1571
        %v1598 = vunpack.c.l.b16 %v1572
        %v1599 = vunpack.c.l.b16 %v1573
        %v1600 = vunpack.c.l.b16 %v1574
        %vm1601 = vcmask 1041409
        %v1602 = vsel %vm1601, %v1598, %v1597
        %vm1603 = vcmask 1042434
        %v1604 = vsel %vm1603, %v1599, %v1602
        %vm1605 = vcmask 1043459
        %v1606 = vsel %vm1605, %v1600, %v1604
        %v1607 = vpack.c.b16 %v1606, %v1606
        %v1625 = vunpack.c.l.b16 %v1575
        %v1626 = vunpack.c.l.b16 %v1576
        %v1627 = vunpack.c.l.b16 %v1577
        %v1628 = vunpack.c.l.b16 %v1578
        %v1629 = vunpack.c.l.b16 %v1579
        %v1630 = vunpack.c.l.b16 %v1580
        %v1631 = vunpack.c.l.b16 %v1581
        %v1632 = vunpack.c.l.b16 %v1582
        %v1633 = vunpack.c.l.b16 %v1583
        %v1634 = vunpack.c.l.b16 %v1584
        %v1635 = vunpack.c.l.b16 %v1585
        %v1636 = vunpack.c.l.b16 %v1586
        %v1637 = vunpack.c.l.b16 %v1587
        %v1638 = vunpack.c.l.b16 %v1588
        %v1639 = vunpack.c.l.b16 %v1589
        %v1640 = vunpack.c.l.b16 %v1590
        %v1641 = vpack.c.b16 %v1626, %v1625
        %v1642 = vpack.c.b16 %v1628, %v1627
        %v1643 = vpack.c.b16 %v1630, %v1629
        %v1644 = vpack.c.b16 %v1632, %v1631
        %v1645 = vpack.c.b16 %v1634, %v1633
        %v1646 = vpack.c.b16 %v1636, %v1635
        %v1647 = vpack.c.b16 %v1638, %v1637
        %v1648 = vpack.c.b16 %v1640, %v1639
        %1657 = vmatpush.bf16.msra.mxu0 %v1648
        %1658 = vmatpush.bf16.msra.mxu0 %v1647
        %1659 = vmatpush.bf16.msra.mxu0 %v1646
        %1660 = vmatpush.bf16.msra.mxu0 %v1645
        %1661 = vmatpush.bf16.msra.mxu0 %v1644
        %1662 = vmatpush.bf16.msra.mxu0 %v1643
        %1663 = vmatpush.bf16.msra.mxu0 %v1642
        %1664 = vmatpush.bf16.msra.mxu0 %v1641
        %1665 = vmatmul.bf16.gmra.mxu0 %v1607
        %v1666 = vpop.f32.mrf.mxu0
        %v1667 = vadd.f32 %v1592, %v1666
        %v1668 = vpop.f32.mrf.mxu0
        %1669 = vdwg.mxu0
        %v1670 = vadd.f32 %v1667, 3.0
        %v1671 = vmax.f32 %v1670, 0.0
        %v1672 = vmin.f32 %v1671, 6.0
        %v1673 = vmul.f32 %v1667, %v1672
        %v1674 = vmul.f32 %v1673, 0.16666667
        %v1675 = vpack.c.bf16 %v1674, %v1674
        %v1676 = vld [vmem:[#allocation10] sm:$0xff]
        %v1677 = vld [vmem:[#allocation10 + $0x8] sm:$0xff]
        %v1678 = vld [vmem:[#allocation10 + $0x10] sm:$0xff]
        %v1679 = vld [vmem:[#allocation10 + $0x18] sm:$0xff]
        %v1680 = vld [vmem:[#allocation10 + $0x20] sm:$0xff]
        %v1681 = vld [vmem:[#allocation10 + $0x28] sm:$0xff]
        %v1682 = vld [vmem:[#allocation10 + $0x30] sm:$0xff]
        %v1683 = vld [vmem:[#allocation10 + $0x38] sm:$0xff]
        %v1684 = vld [vmem:[#allocation10 + $0x40] sm:$0xff]
        %v1685 = vld [vmem:[#allocation10 + $0x48] sm:$0xff]
        %v1686 = vld [vmem:[#allocation10 + $0x50] sm:$0xff]
        %v1687 = vld [vmem:[#allocation10 + $0x58] sm:$0xff]
        %v1688 = vld [vmem:[#allocation10 + $0x60] sm:$0xff]
        %v1689 = vld [vmem:[#allocation10 + $0x68] sm:$0xff]
        %v1690 = vld [vmem:[#allocation10 + $0x70] sm:$0xff]
        %v1691 = vld [vmem:[#allocation10 + $0x78] sm:$0xff]
        %v1708 = vunpack.c.l.b16 %v1676
        %v1709 = vunpack.c.h.b16 %v1676
        %v1710 = vunpack.c.l.b16 %v1677
        %v1711 = vunpack.c.h.b16 %v1677
        %v1712 = vunpack.c.l.b16 %v1678
        %v1713 = vunpack.c.h.b16 %v1678
        %v1714 = vunpack.c.l.b16 %v1679
        %v1715 = vunpack.c.h.b16 %v1679
        %v1716 = vunpack.c.l.b16 %v1680
        %v1717 = vunpack.c.h.b16 %v1680
        %v1718 = vunpack.c.l.b16 %v1681
        %v1719 = vunpack.c.h.b16 %v1681
        %v1720 = vunpack.c.l.b16 %v1682
        %v1721 = vunpack.c.h.b16 %v1682
        %v1722 = vunpack.c.l.b16 %v1683
        %v1723 = vunpack.c.h.b16 %v1683
        %v1724 = vunpack.c.l.b16 %v1684
        %v1725 = vunpack.c.h.b16 %v1684
        %v1726 = vunpack.c.l.b16 %v1685
        %v1727 = vunpack.c.h.b16 %v1685
        %v1728 = vunpack.c.l.b16 %v1686
        %v1729 = vunpack.c.h.b16 %v1686
        %v1730 = vunpack.c.l.b16 %v1687
        %v1731 = vunpack.c.h.b16 %v1687
        %v1732 = vunpack.c.l.b16 %v1688
        %v1733 = vunpack.c.h.b16 %v1688
        %v1734 = vunpack.c.l.b16 %v1689
        %v1735 = vunpack.c.h.b16 %v1689
        %v1736 = vunpack.c.l.b16 %v1690
        %v1737 = vunpack.c.h.b16 %v1690
        %v1738 = vunpack.c.l.b16 %v1691
        %v1739 = vunpack.c.h.b16 %v1691
        %v1740 = vpack.c.b16 %v1710, %v1708
        %v1741 = vpack.c.b16 %v1711, %v1709
        %v1742 = vpack.c.b16 %v1714, %v1712
        %v1743 = vpack.c.b16 %v1715, %v1713
        %v1744 = vpack.c.b16 %v1718, %v1716
        %v1745 = vpack.c.b16 %v1719, %v1717
        %v1746 = vpack.c.b16 %v1722, %v1720
        %v1747 = vpack.c.b16 %v1723, %v1721
        %v1748 = vpack.c.b16 %v1726, %v1724
        %v1749 = vpack.c.b16 %v1727, %v1725
        %v1750 = vpack.c.b16 %v1730, %v1728
        %v1751 = vpack.c.b16 %v1731, %v1729
        %v1752 = vpack.c.b16 %v1734, %v1732
        %v1753 = vpack.c.b16 %v1735, %v1733
        %v1754 = vpack.c.b16 %v1738, %v1736
        %v1755 = vpack.c.b16 %v1739, %v1737
        %1772 = vmatpush.bf16.msra.mxu0 %v1754
        %1773 = vmatpush.bf16.msra.mxu0 %v1752
        %1774 = vmatpush.bf16.msra.mxu0 %v1750
        %1775 = vmatpush.bf16.msra.mxu0 %v1748
        %1776 = vmatpush.bf16.msra.mxu0 %v1746
        %1777 = vmatpush.bf16.msra.mxu0 %v1744
        %1778 = vmatpush.bf16.msra.mxu0 %v1742
        %1779 = vmatpush.bf16.msra.mxu0 %v1740
        %1780 = vmatmul.bf16.gmra.mxu0 %v1675
        %v1781 = vpop.f32.mrf.mxu0
        %v1782 = vadd.f32 0.0, %v1781
        %v1783 = vpop.f32.mrf.mxu0
        %1784 = vdwg.mxu0
        %1785 = vmatpush.bf16.msra.mxu0 %v1755
        %1786 = vmatpush.bf16.msra.mxu0 %v1753
        %1787 = vmatpush.bf16.msra.mxu0 %v1751
        %1788 = vmatpush.bf16.msra.mxu0 %v1749
        %1789 = vmatpush.bf16.msra.mxu0 %v1747
        %1790 = vmatpush.bf16.msra.mxu0 %v1745
        %1791 = vmatpush.bf16.msra.mxu0 %v1743
        %1792 = vmatpush.bf16.msra.mxu0 %v1741
        %1793 = vmatmul.bf16.gmra.mxu0 %v1675
        %v1794 = vpop.f32.mrf.mxu0
        %v1795 = vadd.f32 0.0, %v1794
        %v1796 = vpop.f32.mrf.mxu0
        %1797 = vdwg.mxu0
        %v1798 = vsub.f32 %v1795, %v1782
        %v1799 = vmul.f32 %v1798, 1.442695
        %v1800 = vpow.pop %v1799
        %v1801 = vadd.f32 %v1800, 1.0
        %v1802 = vrcp.pop %v1801
        %v1803 = vsub.f32 1.0, %v1802
        %v1805 = vrot.slane %v1802, 1
        %v1806 = vrot.slane %v1802, 2
        %v1807 = vrot.slane %v1802, 3
        %v1808 = vperm.slane %v1802, 0
        %v1809 = vperm.slane %v1805, 0
        %v1810 = vperm.slane %v1806, 0
        %v1811 = vperm.slane %v1807, 0
        %v1816 = vmul.f32 %v1808, %v1352
        %v1817 = vmul.f32 %v1808, %v1353
        %v1818 = vmul.f32 %v1809, %v1354
        %v1819 = vmul.f32 %v1809, %v1355
        %v1820 = vmul.f32 %v1810, %v1356
        %v1821 = vmul.f32 %v1810, %v1357
        %v1822 = vmul.f32 %v1811, %v1358
        %v1823 = vmul.f32 %v1811, %v1359
        %v1825 = vrot.slane %v1803, 1
        %v1826 = vrot.slane %v1803, 2
        %v1827 = vrot.slane %v1803, 3
        %v1828 = vperm.slane %v1803, 0
        %v1829 = vperm.slane %v1825, 0
        %v1830 = vperm.slane %v1826, 0
        %v1831 = vperm.slane %v1827, 0
        %v1836 = vmul.f32 %v1828, %v1516
        %v1837 = vmul.f32 %v1828, %v1517
        %v1838 = vmul.f32 %v1829, %v1518
        %v1839 = vmul.f32 %v1829, %v1519
        %v1840 = vmul.f32 %v1830, %v1520
        %v1841 = vmul.f32 %v1830, %v1521
        %v1842 = vmul.f32 %v1831, %v1522
        %v1843 = vmul.f32 %v1831, %v1523
        %v1844 = vadd.f32 %v1816, %v1836
        %v1845 = vadd.f32 %v1817, %v1837
        %v1846 = vadd.f32 %v1818, %v1838
        %v1847 = vadd.f32 %v1819, %v1839
        %v1848 = vadd.f32 %v1820, %v1840
        %v1849 = vadd.f32 %v1821, %v1841
        %v1850 = vadd.f32 %v1822, %v1842
        %v1851 = vadd.f32 %v1823, %v1843
        %v1852 = vpack.c.bf16 %v1845, %v1844
        %v1853 = vpack.c.bf16 %v1847, %v1846
        %v1854 = vpack.c.bf16 %v1849, %v1848
        %v1855 = vpack.c.bf16 %v1851, %v1850
        %v1856 = vld [vmem:[#allocation11] sm:$0xf]
        %v1857 = vld [vmem:[#allocation11 + $0x4] sm:$0xf]
        %v1858 = vld [vmem:[#allocation11 + $0x8] sm:$0xf]
        %v1859 = vld [vmem:[#allocation11 + $0xc] sm:$0xf]
        %v1860 = vld [vmem:[#allocation11 + $0x10] sm:$0xf]
        %v1861 = vld [vmem:[#allocation11 + $0x14] sm:$0xf]
        %v1862 = vld [vmem:[#allocation11 + $0x18] sm:$0xf]
        %v1863 = vld [vmem:[#allocation11 + $0x1c] sm:$0xf]
        %v1864 = vld [vmem:[#allocation11 + $0x20] sm:$0xf]
        %v1865 = vld [vmem:[#allocation11 + $0x24] sm:$0xf]
        %v1866 = vld [vmem:[#allocation11 + $0x28] sm:$0xf]
        %v1867 = vld [vmem:[#allocation11 + $0x2c] sm:$0xf]
        %v1868 = vld [vmem:[#allocation11 + $0x30] sm:$0xf]
        %v1869 = vld [vmem:[#allocation11 + $0x34] sm:$0xf]
        %v1870 = vld [vmem:[#allocation11 + $0x38] sm:$0xf]
        %v1871 = vld [vmem:[#allocation11 + $0x3c] sm:$0xf]
        %v1872 = vld [vmem:[#allocation13 + $0x5] sm:$0x1]
        %v1873 = vperm.slane %v1872, 0
        %v1890 = vunpack.c.l.b16 %v1856
        %v1891 = vunpack.c.l.b16 %v1857
        %v1892 = vunpack.c.l.b16 %v1858
        %v1893 = vunpack.c.l.b16 %v1859
        %v1894 = vunpack.c.l.b16 %v1860
        %v1895 = vunpack.c.l.b16 %v1861
        %v1896 = vunpack.c.l.b16 %v1862
        %v1897 = vunpack.c.l.b16 %v1863
        %v1898 = vunpack.c.l.b16 %v1864
        %v1899 = vunpack.c.l.b16 %v1865
        %v1900 = vunpack.c.l.b16 %v1866
        %v1901 = vunpack.c.l.b16 %v1867
        %v1902 = vunpack.c.l.b16 %v1868
        %v1903 = vunpack.c.l.b16 %v1869
        %v1904 = vunpack.c.l.b16 %v1870
        %v1905 = vunpack.c.l.b16 %v1871
        %v1906 = vpack.c.b16 %v1891, %v1890
        %v1907 = vpack.c.b16 %v1893, %v1892
        %v1908 = vpack.c.b16 %v1895, %v1894
        %v1909 = vpack.c.b16 %v1897, %v1896
        %v1910 = vpack.c.b16 %v1899, %v1898
        %v1911 = vpack.c.b16 %v1901, %v1900
        %v1912 = vpack.c.b16 %v1903, %v1902
        %v1913 = vpack.c.b16 %v1905, %v1904
        %1922 = vmatpush.bf16.msra.mxu0 %v1913
        %1923 = vmatpush.bf16.msra.mxu0 %v1912
        %1924 = vmatpush.bf16.msra.mxu0 %v1911
        %1925 = vmatpush.bf16.msra.mxu0 %v1910
        %1926 = vmatpush.bf16.msra.mxu0 %v1909
        %1927 = vmatpush.bf16.msra.mxu0 %v1908
        %1928 = vmatpush.bf16.msra.mxu0 %v1907
        %1929 = vmatpush.bf16.msra.mxu0 %v1906
        %1930 = vmatmul.bf16.gmra.mxu0 %v1852
        %v1931 = vpop.f32.mrf.mxu0
        %v1932 = vadd.f32 %v1873, %v1931
        %v1933 = vpop.f32.mrf.mxu0
        %v1934 = vadd.f32 %v1873, %v1933
        %1935 = vmatmul.bf16.gmra.mxu0 %v1853
        %v1936 = vpop.f32.mrf.mxu0
        %v1937 = vadd.f32 %v1873, %v1936
        %v1938 = vpop.f32.mrf.mxu0
        %v1939 = vadd.f32 %v1873, %v1938
        %1940 = vmatmul.bf16.gmra.mxu0 %v1854
        %v1941 = vpop.f32.mrf.mxu0
        %v1942 = vadd.f32 %v1873, %v1941
        %v1943 = vpop.f32.mrf.mxu0
        %v1944 = vadd.f32 %v1873, %v1943
        %1945 = vmatmul.bf16.gmra.mxu0 %v1855
        %v1946 = vpop.f32.mrf.mxu0
        %v1947 = vadd.f32 %v1873, %v1946
        %v1948 = vpop.f32.mrf.mxu0
        %v1949 = vadd.f32 %v1873, %v1948
        %1950 = vdwg.mxu0
        %v1951 = vadd.f32 %v617, %v1932
        %v1952 = vadd.f32 %v618, %v1934
        %v1953 = vadd.f32 %v619, %v1937
        %v1954 = vadd.f32 %v620, %v1939
        %v1955 = vadd.f32 %v621, %v1942
        %v1956 = vadd.f32 %v622, %v1944
        %v1957 = vadd.f32 %v623, %v1947
        %v1958 = vadd.f32 %v624, %v1949
        %1959 = vst [vmem:[%s396] sm:$0xff] %v1951
        %1960 = vst [vmem:[%s396 + $0x8] sm:$0xff] %v1952
        %1961 = vst [vmem:[%s396 + $0x10] sm:$0xff] %v1953
        %1962 = vst [vmem:[%s396 + $0x18] sm:$0xff] %v1954
        %1963 = vst [vmem:[%s396 + $0x20] sm:$0xff] %v1955
        %1964 = vst [vmem:[%s396 + $0x28] sm:$0xff] %v1956
        %1965 = vst [vmem:[%s396 + $0x30] sm:$0xff] %v1957
        %1966 = vst [vmem:[%s396 + $0x38] sm:$0xff] %v1958
        %s1967 = sand.u32 %s187, 1
        %s1968 = scalar_lea.sflag [#allocation4], %s1967
        %s1969 = sand.u32 %s187, 1
        %s1970 = smul.addr %s1969, 64
        %s1971 = scalar_lea.vmem [#allocation14], %s1970
        // Predicated region
        $region77: #{tpu_custom_call.1} parent=47 // pred_check
          %p1972 = pneg %p197
        $region78: #{tpu_custom_call.1} parent=47 // pred_check_branch
          %1974 = sbr.rel (%p1972) target = $region80
        $region79: #{tpu_custom_call.1} parent=47 // pred_region
          %s1975 = smul.u32 4, %s27
          %1977 = vsyncadd %s1968, 0
          %s1978 = smul.addr %s1975, 2
          %s1979 = smul.addr %s1978, 8
          %s1980 = scalar_lea.hbm %s7, %s1979
          %s1981 = sshll.u32 %s1971, 4
          %s1982 = int_to_ptr.vmem [resolvable:$true] %s1981
          %s1983 = sshll.u32 %s1980, 4
          %s1984 = int_to_ptr.hbm [resolvable:$true] %s1983
          %1989 = dma.vmem_to_hbm [thread:$0]  %s1982, 1024, %s1984, %s1968, 128, 128, 8
        $region80: #{tpu_custom_call.1} parent=47 // pred_fallthru
          _
      $region48: #{tpu_custom_call.1} parent=5 // pred_fallthru
        _
      %p1990 = scmp.le.s32.totalorder 2, %s22
      // Predicated region
      $region81: #{tpu_custom_call.1} parent=5 // pred_check
        %p1991 = pneg %p1990
      $region82: #{tpu_custom_call.1} parent=5 // pred_check_branch
        %1993 = sbr.rel (%p1991) target = $region84
      $region83: #{tpu_custom_call.1} parent=5 // pred_region
        %s1994 = ssub.s32 %s22, 2
        // Predicated region
        $region85: #{tpu_custom_call.1} parent=83 // pred_check
          %p1995 = pneg %p203
        $region86: #{tpu_custom_call.1} parent=83 // pred_check_branch
          %1997 = sbr.rel (%p1995) target = $region88
        $region87: #{tpu_custom_call.1} parent=83 // pred_region
          %s1998 = sand.u32 %s188, 1
          %s1999 = scalar_lea.sflag [#allocation4], %s1998
          %s2000 = sand.u32 %s188, 1
          %s2001 = smul.addr %s2000, 64
          %s2002 = scalar_lea.vmem [#allocation14], %s2001
          %2004 = dma.done %s1999, 1024
        $region88: #{tpu_custom_call.1} parent=83 // pred_fallthru
          _
      $region84: #{tpu_custom_call.1} parent=5 // pred_fallthru
        _
    $region6: #{tpu_custom_call.1} parent=1 // loop_footer
      %s26 = sadd.s32 1, %s22
    $region7: #{tpu_custom_call.1} parent=1 // loop_footer_branch
      %21 = sbr.rel target = $region3
    $region8: #{tpu_custom_call.1} parent=1 // loop_exit
      _
    %2005 = vsyncpa [#allocation3], 1
    %s2006 = scalar_lea.sflag [#allocation3], 1
    %2007 = vsyncpa %s2006, 1
    %2008 = vsyncpa [#allocation6], 1
    %2009 = vsyncpa [#allocation9], 1
    %2010 = vsyncpa [#allocation12], 1
    %2011 = vsyncpa [#allocation4], 1
    %s2012 = scalar_lea.sflag [#allocation4], 1
    %2013 = vsyncpa %s2012, 1

</llo_original>
